<compile_context>
chip_gen: v7x
topology: tpu7x:2x2x1
jax: 0.10.0
libtpu: 0.0.40
codegen_flags: <defaults>
</compile_context>

<pallas_src>
import math
import jax
import jax.numpy as jnp
from jax.experimental import pallas as pl
from jax.experimental.pallas import tpu as pltpu


# ----------------------------------------------------------------------------------
# Fused per-level kernel (one grid step == one image):
#   lat = relu(x @ W1 + b1)                      # 1x1 ConvBNReLU (per token matmul)
#   pad = A_pad @ lat                            # bilinear resize + zero pad, flattened
#                                                #   row-major with (Wp+1) zero guards
#   out = relu(sum_t pad[shift_t] @ W3[t] + b2)  # 3x3 ConvBNReLU as 9 shifted matmuls
# ----------------------------------------------------------------------------------
def _row_chunks(total, size):
    out, s = [], 0
    while s < total:
        out.append((s, min(size, total - s)))
        s += size
    return out


def _make_fused_kernel(Wp, HpWp, Lpad, t_rows=1024):
    s1 = _row_chunks(Lpad, t_rows)   # resize-matmul row chunks
    s2 = _row_chunks(HpWp, t_rows)   # conv output row chunks

    def kernel(x_ref, w1_ref, b1_ref, a_ref, w9_ref, b2_ref, o_ref,
               lat_ref, pad_ref):
        # x_ref: (1, HW, Cin); w1_ref: (Cin, Co); b1_ref: (1, Co)
        # a_ref: (Lpad, HW);   w9_ref: (9, Co, Co); b2_ref: (1, Co)
        # o_ref: (1, HpWp, Co)
        # lat_ref scratch: (HW, Co); pad_ref scratch: (Lpad, Co)

        # ---- stage 0: lateral 1x1 conv + folded BN + ReLU (stays in VMEM) ----
        lat_ref[...] = jnp.maximum(
            jnp.dot(x_ref[0], w1_ref[...], preferred_element_type=jnp.float32)
            + b1_ref[...], 0.0)

        # ---- stage 1: bilinear resize + zero padding as one matmul (row chunks) ----
        for r0, rows in s1:
            pad_ref[r0:r0 + rows, :] = jnp.dot(
                a_ref[r0:r0 + rows, :], lat_ref[...],
                preferred_element_type=jnp.float32)

        # ---- stage 2: direct 3x3 conv from 9 shifted row-slices of pad_ref ----
        bias = b2_ref[...]                                    # (1, Co)
        for k0, rows in s2:
            acc = None
            for t in range(9):
                dy, dx = divmod(t, 3)
                off = k0 + dy * Wp + dx                       # static offset per tap
                part = jnp.dot(pad_ref[off:off + rows, :], w9_ref[t],
                               preferred_element_type=jnp.float32)
                acc = part if acc is None else acc + part
            o_ref[0, k0:k0 + rows, :] = jnp.maximum(acc + bias, 0.0).astype(o_ref.dtype)

    return kernel


# ----------------------------------------------------------------------------------
# Interpolation matrices (match F.interpolate(mode='bilinear', align_corners=True)).
# ----------------------------------------------------------------------------------
def bilinear_matrix_align_corners(out_size, in_size):
    if out_size == 1:
        return jnp.zeros((1, in_size), jnp.float32).at[0, 0].set(1.0)
    o = jnp.arange(out_size, dtype=jnp.float32)
    src = o * (in_size - 1) / (out_size - 1)
    i0 = jnp.clip(jnp.floor(src).astype(jnp.int32), 0, in_size - 1)
    i1 = jnp.minimum(i0 + 1, in_size - 1)
    frac = src - i0.astype(jnp.float32)
    rows = jnp.arange(out_size)
    A = jnp.zeros((out_size, in_size), jnp.float32)
    A = A.at[rows, i0].add(1.0 - frac)
    A = A.at[rows, i1].add(frac)
    return A


def resize_pad_matrix(out_h, out_w, in_h, in_w):
    """(Hp*Wp + 2*(Wp+1), in_h*in_w): flattened resized-and-zero-padded image with
    (Wp+1)-row zero guards = A_pad @ x_flat."""
    Ah = bilinear_matrix_align_corners(out_h, in_h)
    Aw = bilinear_matrix_align_corners(out_w, in_w)
    K = jnp.kron(Ah, Aw)                               # (out_h*out_w, in_h*in_w)
    Hp, Wp = out_h + 2, out_w + 2
    HW = in_h * in_w
    A = jnp.zeros((Hp, Wp, HW), jnp.float32)
    A = A.at[1:Hp - 1, 1:Wp - 1, :].set(K.reshape(out_h, out_w, HW))
    A = A.reshape(Hp * Wp, HW)
    guard = Wp + 1
    return jnp.pad(A, ((guard, guard), (0, 0)))


# ----------------------------------------------------------------------------------
# Per-level fused pallas_call wrapper.
# ----------------------------------------------------------------------------------
def fused_level(x, w1, b1, A_pad, w9, b2, out_h, out_w):
    """x: (N, H*W, Cin) tokens; returns (N, out_h, out_w, Cout) NHWC."""
    N, HW, Cin = x.shape
    Cout = w1.shape[1]
    Hp, Wp = out_h + 2, out_w + 2
    HpWp = Hp * Wp
    Lpad = A_pad.shape[0]
    kernel = _make_fused_kernel(Wp, HpWp, Lpad)

    out = pl.pallas_call(
        kernel,
        out_shape=jax.ShapeDtypeStruct((N, HpWp, Cout), jnp.float32),
        grid_spec=pltpu.PrefetchScalarGridSpec(
            num_scalar_prefetch=0,
            grid=(N,),
            in_specs=[
                pl.BlockSpec((1, HW, Cin), lambda n: (n, 0, 0)),
                pl.BlockSpec((Cin, Cout), lambda n: (0, 0)),      # constant -> 1 DMA
                pl.BlockSpec((1, Cout), lambda n: (0, 0)),
                pl.BlockSpec((Lpad, HW), lambda n: (0, 0)),       # resize matrix, 1 DMA
                pl.BlockSpec((9, Cout, Cout), lambda n: (0, 0, 0)),
                pl.BlockSpec((1, Cout), lambda n: (0, 0)),
            ],
            out_specs=pl.BlockSpec((1, HpWp, Cout), lambda n: (n, 0, 0)),
            scratch_shapes=[
                pltpu.VMEM((HW, Cout), jnp.float32),     # lateral activation
                pltpu.VMEM((Lpad, Cout), jnp.float32),   # resized + padded feature map
            ],
        ),
        compiler_params=pltpu.CompilerParams(
            dimension_semantics=("parallel",),
            vmem_limit_bytes=48 * 1024 * 1024),
    )(x, w1, b1.reshape(1, Cout), A_pad, w9, b2.reshape(1, Cout))

    # only interior conv outputs are valid (padded border is cropped)
    return out.reshape(N, Hp, Wp, Cout)[:, 1:-1, 1:-1, :]


# ----------------------------------------------------------------------------------
# Parameters (deterministic, in-script). BatchNorm folded to per-channel affine.
# ----------------------------------------------------------------------------------
def _xavier_uniform(key, shape, fan_in, fan_out):
    bound = math.sqrt(6.0 / (fan_in + fan_out))
    return jax.random.uniform(key, shape, jnp.float32, -bound, bound)


def _fold_bn(gamma, beta, mean, var, eps=1e-5):
    scale = gamma / jnp.sqrt(var + eps)
    return scale, beta - mean * scale


def _bn_params(keys, c):
    gamma = jax.random.uniform(keys[0], (c,), jnp.float32, 0.5, 1.5)
    beta = jax.random.uniform(keys[1], (c,), jnp.float32, -0.1, 0.1)
    mean = 0.1 * jax.random.normal(keys[2], (c,), jnp.float32)
    var = jax.random.uniform(keys[3], (c,), jnp.float32, 0.5, 1.5)
    return _fold_bn(gamma, beta, mean, var)


def init_params(key, in_channels, out_channels, num_outs):
    params = {"lateral": [], "conv": []}
    for cin in in_channels:
        key, kw, k1, k2, k3, k4 = jax.random.split(key, 6)
        w = _xavier_uniform(kw, (cin, out_channels), cin, out_channels)        # 1x1
        scale, bias = _bn_params((k1, k2, k3, k4), out_channels)
        params["lateral"].append({"w": w, "scale": scale, "bias": bias})
    for _ in range(num_outs):
        key, kw, k1, k2, k3, k4 = jax.random.split(key, 6)
        w = _xavier_uniform(kw, (3, 3, out_channels, out_channels),
                            9 * out_channels, 9 * out_channels)                # HWIO
        scale, bias = _bn_params((k1, k2, k3, k4), out_channels)
        params["conv"].append({"w": w, "scale": scale, "bias": bias})
    return params


# ----------------------------------------------------------------------------------
# Forward pass (mirrors MultiLevelNeck.forward).
# ----------------------------------------------------------------------------------
def multilevel_neck_apply(params, inputs, *, in_index=(2, 5, 8, 11),
                          scales=(0.5, 1, 2, 4)):
    feats, shapes = [], []
    for idx in in_index:
        x = inputs[idx]
        N, HW, Cin = x.shape
        h = w = int(math.sqrt(HW))
        feats.append(x)                       # (N, HW, Cin) token layout (row-major HW)
        shapes.append((N, h, w))

    lat_params = params["lateral"]
    if len(feats) == 1:                       # torch: replicate single lateral output
        feats = [feats[0]] * len(scales)
        shapes = [shapes[0]] * len(scales)
        lat_params = [lat_params[0]] * len(scales)

    outs = []
    for i, s in enumerate(scales):
        N, H, W = shapes[i]
        # F.interpolate(..., recompute_scale_factor=True): out = floor(in * scale)
        out_h, out_w = int(math.floor(H * s)), int(math.floor(W * s))
        lp, cp = lat_params[i], params["conv"][i]
        Cout = lp["w"].shape[1]
        w1 = lp["w"] * lp["scale"][None, :]                    # fold BN scale (1x1)
        w9 = (cp["w"] * cp["scale"]).reshape(9, Cout, Cout)    # fold BN scale (3x3)
        A_pad = resize_pad_matrix(out_h, out_w, H, W)
        y = fused_level(feats[i], w1, lp["bias"], A_pad, w9, cp["bias"], out_h, out_w)
        outs.append(jnp.transpose(y, (0, 3, 1, 2)))            # NCHW like torch
    return tuple(outs)


# ----------------------------------------------------------------------------------
# Pure-JAX reference (separable resize + lax.conv) for correctness checking.
# ----------------------------------------------------------------------------------
def _reference_forward(params, inputs, in_index, scales):
    feats, shapes = [], []
    for idx in in_index:
        x = inputs[idx]
        N, HW, Cin = x.shape
        h = w = int(math.sqrt(HW))
        feats.append(x)
        shapes.append((N, h, w))
    lats = [jnp.maximum(f @ (p["w"] * p["scale"][None, :]) + p["bias"], 0.0)
            for f, p in zip(feats, params["lateral"])]
    if len(lats) == 1:
        lats = [lats[0]] * len(scales)
        shapes = [shapes[0]] * len(scales)
    outs = []
    for i, s in enumerate(scales):
        N, H, W = shapes[i]
        Co = lats[i].shape[-1]
        out_h, out_w = int(math.floor(H * s)), int(math.floor(W * s))
        img = lats[i].reshape(N, H, W, Co)
        Ah = bilinear_matrix_align_corners(out_h, H)
        Aw = bilinear_matrix_align_corners(out_w, W)
        r = jnp.einsum('oh,nhwc->nowc', Ah, img)
        r = jnp.einsum('pw,nowc->nopc', Aw, r)
        p = params["conv"][i]
        wk = p["w"] * p["scale"]                                # (3,3,Co,Co) HWIO
        y = jax.lax.conv_general_dilated(
            r, wk, window_strides=(1, 1), padding=((1, 1), (1, 1)),
            dimension_numbers=('NHWC', 'HWIO', 'NHWC'))
        y = jnp.maximum(y + p["bias"], 0.0)
        outs.append(jnp.transpose(y, (0, 3, 1, 2)))
    return tuple(outs)


if __name__ == "__main__":
    key = jax.random.PRNGKey(0)
    N, H, W = 2, 16, 16
    Cin, Cout = 32, 32
    in_channels = [Cin] * 4
    in_index = (2, 5, 8, 11)
    scales = (0.5, 1, 2, 4)

    key, pkey = jax.random.split(key)
    params = init_params(pkey, in_channels, Cout, len(scales))

    # 12 ViT-style token maps (N, HW, C); only in_index entries are consumed.
    inputs = []
    for _ in range(12):
        key, sub = jax.random.split(key)
        inputs.append(jax.random.normal(sub, (N, H * W, Cin), jnp.float32))

    outs = multilevel_neck_apply(params, inputs, in_index=in_index, scales=scales)
    outs = jax.block_until_ready(outs)

    expected = tuple((N, Cout, int(math.floor(H * s)), int(math.floor(W * s)))
                     for s in scales)
    got = tuple(o.shape for o in outs)
    assert got == expected, (got, expected)
    assert all(o.dtype == jnp.float32 for o in outs)
    assert all(bool(jnp.all(o >= 0)) for o in outs)        # ReLU outputs

    refs = jax.block_until_ready(_reference_forward(params, inputs, in_index, scales))
    for o, r in zip(outs, refs):
        err = float(jnp.max(jnp.abs(o - r)))
        assert jnp.allclose(o, r, rtol=1e-3, atol=1e-3), err

    print("KERNEL_OK")
</pallas_src>

<mosaic_0001>
module attributes {stable_mosaic.version = 11 : i64} {
  func.func @kernel(%arg0: i32, %arg1: memref<1x256x32xf32, #tpu.memory_space<vmem>>, %arg2: memref<32x32xf32, #tpu.memory_space<vmem>>, %arg3: memref<1x32xf32, #tpu.memory_space<vmem>>, %arg4: memref<122x256xf32, #tpu.memory_space<vmem>>, %arg5: memref<9x32x32xf32, #tpu.memory_space<vmem>>, %arg6: memref<1x32xf32, #tpu.memory_space<vmem>>, %arg7: memref<1x100x32xf32, #tpu.memory_space<vmem>>, %arg8: memref<256x32xf32, #tpu.memory_space<vmem>>, %arg9: memref<122x32xf32, #tpu.memory_space<vmem>>) attributes {dimension_semantics = [#tpu.dimension_semantics<parallel>], iteration_bounds = array<i64: 2>, scalar_prefetch = 0 : i64, scratch_operands = 2 : i64, tpu.core_type = #tpu.core_type<tc>, window_params = [{transform_indices = @transform_0, window_bounds = array<i64: 1, 256, 32>}, {pipeline_mode = #tpu.pipeline_mode<synchronous>, transform_indices = @transform_1, window_bounds = array<i64: 32, 32>}, {pipeline_mode = #tpu.pipeline_mode<synchronous>, transform_indices = @transform_2, window_bounds = array<i64: 1, 32>}, {pipeline_mode = #tpu.pipeline_mode<synchronous>, transform_indices = @transform_3, window_bounds = array<i64: 122, 256>}, {pipeline_mode = #tpu.pipeline_mode<synchronous>, transform_indices = @transform_4, window_bounds = array<i64: 9, 32, 32>}, {pipeline_mode = #tpu.pipeline_mode<synchronous>, transform_indices = @transform_5, window_bounds = array<i64: 1, 32>}, {transform_indices = @transform_6, window_bounds = array<i64: 1, 100, 32>}]} {
    %c0 = arith.constant 0 : index
    %c0_0 = arith.constant 0 : index
    %c0_1 = arith.constant 0 : index
    %0 = vector.load %arg1[%c0, %c0_0, %c0_1] : memref<1x256x32xf32, #tpu.memory_space<vmem>>, vector<1x256x32xf32>
    %1 = vector.shape_cast %0 : vector<1x256x32xf32> to vector<256x32xf32>
    %c0_2 = arith.constant 0 : index
    %c0_3 = arith.constant 0 : index
    %2 = vector.load %arg2[%c0_2, %c0_3] : memref<32x32xf32, #tpu.memory_space<vmem>>, vector<32x32xf32>
    %cst = arith.constant dense<0.000000e+00> : vector<256x32xf32>
    %3 = tpu.matmul %1, %2, %cst {dimension_numbers = #tpu.dot_dimension_numbers<[1], [0], [0], [1], [0, 0, 1, 1], [], []>} : vector<256x32xf32>, vector<32x32xf32>, vector<256x32xf32> -> vector<256x32xf32>
    %c0_4 = arith.constant 0 : index
    %c0_5 = arith.constant 0 : index
    %4 = vector.load %arg3[%c0_4, %c0_5] : memref<1x32xf32, #tpu.memory_space<vmem>>, vector<1x32xf32>
    %5 = vector.broadcast %4 : vector<1x32xf32> to vector<256x32xf32>
    %6 = arith.addf %3, %5 : vector<256x32xf32>
    %cst_6 = arith.constant 0.000000e+00 : f32
    %7 = vector.broadcast %cst_6 : f32 to vector<256x32xf32>
    %8 = arith.maximumf %6, %7 : vector<256x32xf32>
    %c0_7 = arith.constant 0 : index
    %c0_8 = arith.constant 0 : index
    %9 = vector.load %arg8[%c0_7, %c0_8] : memref<256x32xf32, #tpu.memory_space<vmem>>, vector<256x32xf32>
    tpu.vector_store %arg8[%c0_7, %c0_8], %8 {strides = array<i32>} : memref<256x32xf32, #tpu.memory_space<vmem>>, vector<256x32xf32>,
    %c0_9 = arith.constant 0 : index
    %c0_10 = arith.constant 0 : index
    %10 = vector.load %arg4[%c0_9, %c0_10] : memref<122x256xf32, #tpu.memory_space<vmem>>, vector<122x256xf32>
    %c0_11 = arith.constant 0 : index
    %c0_12 = arith.constant 0 : index
    %11 = vector.load %arg8[%c0_11, %c0_12] : memref<256x32xf32, #tpu.memory_space<vmem>>, vector<256x32xf32>
    %cst_13 = arith.constant dense<0.000000e+00> : vector<122x32xf32>
    %12 = tpu.matmul %10, %11, %cst_13 {dimension_numbers = #tpu.dot_dimension_numbers<[1], [0], [0], [1], [0, 0, 1, 1], [], []>} : vector<122x256xf32>, vector<256x32xf32>, vector<122x32xf32> -> vector<122x32xf32>
    %c0_14 = arith.constant 0 : index
    %c0_15 = arith.constant 0 : index
    %13 = vector.load %arg9[%c0_14, %c0_15] : memref<122x32xf32, #tpu.memory_space<vmem>>, vector<122x32xf32>
    tpu.vector_store %arg9[%c0_14, %c0_15], %12 {strides = array<i32>} : memref<122x32xf32, #tpu.memory_space<vmem>>, vector<122x32xf32>,
    %c0_16 = arith.constant 0 : index
    %c0_17 = arith.constant 0 : index
    %14 = vector.load %arg6[%c0_16, %c0_17] : memref<1x32xf32, #tpu.memory_space<vmem>>, vector<1x32xf32>
    %c0_18 = arith.constant 0 : index
    %c0_19 = arith.constant 0 : index
    %15 = vector.load %arg9[%c0_18, %c0_19] : memref<122x32xf32, #tpu.memory_space<vmem>>, vector<100x32xf32>
    %c0_20 = arith.constant 0 : index
    %c0_21 = arith.constant 0 : index
    %c0_22 = arith.constant 0 : index
    %16 = vector.load %arg5[%c0_20, %c0_21, %c0_22] : memref<9x32x32xf32, #tpu.memory_space<vmem>>, vector<1x32x32xf32>
    %17 = vector.shape_cast %16 : vector<1x32x32xf32> to vector<32x32xf32>
    %cst_23 = arith.constant dense<0.000000e+00> : vector<100x32xf32>
    %18 = tpu.matmul %15, %17, %cst_23 {dimension_numbers = #tpu.dot_dimension_numbers<[1], [0], [0], [1], [0, 0, 1, 1], [], []>} : vector<100x32xf32>, vector<32x32xf32>, vector<100x32xf32> -> vector<100x32xf32>
    %c1 = arith.constant 1 : index
    %c0_24 = arith.constant 0 : index
    %19 = vector.load %arg9[%c1, %c0_24] : memref<122x32xf32, #tpu.memory_space<vmem>>, vector<100x32xf32>
    %c1_25 = arith.constant 1 : index
    %c0_26 = arith.constant 0 : index
    %c0_27 = arith.constant 0 : index
    %20 = vector.load %arg5[%c1_25, %c0_26, %c0_27] : memref<9x32x32xf32, #tpu.memory_space<vmem>>, vector<1x32x32xf32>
    %21 = vector.shape_cast %20 : vector<1x32x32xf32> to vector<32x32xf32>
    %cst_28 = arith.constant dense<0.000000e+00> : vector<100x32xf32>
    %22 = tpu.matmul %19, %21, %cst_28 {dimension_numbers = #tpu.dot_dimension_numbers<[1], [0], [0], [1], [0, 0, 1, 1], [], []>} : vector<100x32xf32>, vector<32x32xf32>, vector<100x32xf32> -> vector<100x32xf32>
    %23 = arith.addf %18, %22 : vector<100x32xf32>
    %c2 = arith.constant 2 : index
    %c0_29 = arith.constant 0 : index
    %24 = vector.load %arg9[%c2, %c0_29] : memref<122x32xf32, #tpu.memory_space<vmem>>, vector<100x32xf32>
    %c2_30 = arith.constant 2 : index
    %c0_31 = arith.constant 0 : index
    %c0_32 = arith.constant 0 : index
    %25 = vector.load %arg5[%c2_30, %c0_31, %c0_32] : memref<9x32x32xf32, #tpu.memory_space<vmem>>, vector<1x32x32xf32>
    %26 = vector.shape_cast %25 : vector<1x32x32xf32> to vector<32x32xf32>
    %cst_33 = arith.constant dense<0.000000e+00> : vector<100x32xf32>
    %27 = tpu.matmul %24, %26, %cst_33 {dimension_numbers = #tpu.dot_dimension_numbers<[1], [0], [0], [1], [0, 0, 1, 1], [], []>} : vector<100x32xf32>, vector<32x32xf32>, vector<100x32xf32> -> vector<100x32xf32>
    %28 = arith.addf %23, %27 : vector<100x32xf32>
    %c10 = arith.constant 10 : index
    %c0_34 = arith.constant 0 : index
    %29 = vector.load %arg9[%c10, %c0_34] : memref<122x32xf32, #tpu.memory_space<vmem>>, vector<100x32xf32>
    %c3 = arith.constant 3 : index
    %c0_35 = arith.constant 0 : index
    %c0_36 = arith.constant 0 : index
    %30 = vector.load %arg5[%c3, %c0_35, %c0_36] : memref<9x32x32xf32, #tpu.memory_space<vmem>>, vector<1x32x32xf32>
    %31 = vector.shape_cast %30 : vector<1x32x32xf32> to vector<32x32xf32>
    %cst_37 = arith.constant dense<0.000000e+00> : vector<100x32xf32>
    %32 = tpu.matmul %29, %31, %cst_37 {dimension_numbers = #tpu.dot_dimension_numbers<[1], [0], [0], [1], [0, 0, 1, 1], [], []>} : vector<100x32xf32>, vector<32x32xf32>, vector<100x32xf32> -> vector<100x32xf32>
    %33 = arith.addf %28, %32 : vector<100x32xf32>
    %c11 = arith.constant 11 : index
    %c0_38 = arith.constant 0 : index
    %34 = vector.load %arg9[%c11, %c0_38] : memref<122x32xf32, #tpu.memory_space<vmem>>, vector<100x32xf32>
    %c4 = arith.constant 4 : index
    %c0_39 = arith.constant 0 : index
    %c0_40 = arith.constant 0 : index
    %35 = vector.load %arg5[%c4, %c0_39, %c0_40] : memref<9x32x32xf32, #tpu.memory_space<vmem>>, vector<1x32x32xf32>
    %36 = vector.shape_cast %35 : vector<1x32x32xf32> to vector<32x32xf32>
    %cst_41 = arith.constant dense<0.000000e+00> : vector<100x32xf32>
    %37 = tpu.matmul %34, %36, %cst_41 {dimension_numbers = #tpu.dot_dimension_numbers<[1], [0], [0], [1], [0, 0, 1, 1], [], []>} : vector<100x32xf32>, vector<32x32xf32>, vector<100x32xf32> -> vector<100x32xf32>
    %38 = arith.addf %33, %37 : vector<100x32xf32>
    %c12 = arith.constant 12 : index
    %c0_42 = arith.constant 0 : index
    %39 = vector.load %arg9[%c12, %c0_42] : memref<122x32xf32, #tpu.memory_space<vmem>>, vector<100x32xf32>
    %c5 = arith.constant 5 : index
    %c0_43 = arith.constant 0 : index
    %c0_44 = arith.constant 0 : index
    %40 = vector.load %arg5[%c5, %c0_43, %c0_44] : memref<9x32x32xf32, #tpu.memory_space<vmem>>, vector<1x32x32xf32>
    %41 = vector.shape_cast %40 : vector<1x32x32xf32> to vector<32x32xf32>
    %cst_45 = arith.constant dense<0.000000e+00> : vector<100x32xf32>
    %42 = tpu.matmul %39, %41, %cst_45 {dimension_numbers = #tpu.dot_dimension_numbers<[1], [0], [0], [1], [0, 0, 1, 1], [], []>} : vector<100x32xf32>, vector<32x32xf32>, vector<100x32xf32> -> vector<100x32xf32>
    %43 = arith.addf %38, %42 : vector<100x32xf32>
    %c20 = arith.constant 20 : index
    %c0_46 = arith.constant 0 : index
    %44 = vector.load %arg9[%c20, %c0_46] : memref<122x32xf32, #tpu.memory_space<vmem>>, vector<100x32xf32>
    %c6 = arith.constant 6 : index
    %c0_47 = arith.constant 0 : index
    %c0_48 = arith.constant 0 : index
    %45 = vector.load %arg5[%c6, %c0_47, %c0_48] : memref<9x32x32xf32, #tpu.memory_space<vmem>>, vector<1x32x32xf32>
    %46 = vector.shape_cast %45 : vector<1x32x32xf32> to vector<32x32xf32>
    %cst_49 = arith.constant dense<0.000000e+00> : vector<100x32xf32>
    %47 = tpu.matmul %44, %46, %cst_49 {dimension_numbers = #tpu.dot_dimension_numbers<[1], [0], [0], [1], [0, 0, 1, 1], [], []>} : vector<100x32xf32>, vector<32x32xf32>, vector<100x32xf32> -> vector<100x32xf32>
    %48 = arith.addf %43, %47 : vector<100x32xf32>
    %c21 = arith.constant 21 : index
    %c0_50 = arith.constant 0 : index
    %49 = vector.load %arg9[%c21, %c0_50] : memref<122x32xf32, #tpu.memory_space<vmem>>, vector<100x32xf32>
    %c7 = arith.constant 7 : index
    %c0_51 = arith.constant 0 : index
    %c0_52 = arith.constant 0 : index
    %50 = vector.load %arg5[%c7, %c0_51, %c0_52] : memref<9x32x32xf32, #tpu.memory_space<vmem>>, vector<1x32x32xf32>
    %51 = vector.shape_cast %50 : vector<1x32x32xf32> to vector<32x32xf32>
    %cst_53 = arith.constant dense<0.000000e+00> : vector<100x32xf32>
    %52 = tpu.matmul %49, %51, %cst_53 {dimension_numbers = #tpu.dot_dimension_numbers<[1], [0], [0], [1], [0, 0, 1, 1], [], []>} : vector<100x32xf32>, vector<32x32xf32>, vector<100x32xf32> -> vector<100x32xf32>
    %53 = arith.addf %48, %52 : vector<100x32xf32>
    %c22 = arith.constant 22 : index
    %c0_54 = arith.constant 0 : index
    %54 = vector.load %arg9[%c22, %c0_54] : memref<122x32xf32, #tpu.memory_space<vmem>>, vector<100x32xf32>
    %c8 = arith.constant 8 : index
    %c0_55 = arith.constant 0 : index
    %c0_56 = arith.constant 0 : index
    %55 = vector.load %arg5[%c8, %c0_55, %c0_56] : memref<9x32x32xf32, #tpu.memory_space<vmem>>, vector<1x32x32xf32>
    %56 = vector.shape_cast %55 : vector<1x32x32xf32> to vector<32x32xf32>
    %cst_57 = arith.constant dense<0.000000e+00> : vector<100x32xf32>
    %57 = tpu.matmul %54, %56, %cst_57 {dimension_numbers = #tpu.dot_dimension_numbers<[1], [0], [0], [1], [0, 0, 1, 1], [], []>} : vector<100x32xf32>, vector<32x32xf32>, vector<100x32xf32> -> vector<100x32xf32>
    %58 = arith.addf %53, %57 : vector<100x32xf32>
    %59 = vector.broadcast %14 : vector<1x32xf32> to vector<100x32xf32>
    %60 = arith.addf %58, %59 : vector<100x32xf32>
    %cst_58 = arith.constant 0.000000e+00 : f32
    %61 = vector.broadcast %cst_58 : f32 to vector<100x32xf32>
    %62 = arith.maximumf %60, %61 : vector<100x32xf32>
    %c0_59 = arith.constant 0 : index
    %c0_60 = arith.constant 0 : index
    %c0_61 = arith.constant 0 : index
    %63 = vector.load %arg7[%c0_59, %c0_60, %c0_61] : memref<1x100x32xf32, #tpu.memory_space<vmem>>, vector<1x100x32xf32>
    %64 = vector.shape_cast %63 : vector<1x100x32xf32> to vector<100x32xf32>
    %65 = vector.shape_cast %62 : vector<100x32xf32> to vector<1x100x32xf32>
    tpu.vector_store %arg7[%c0_59, %c0_60, %c0_61], %65 {strides = array<i32>} : memref<1x100x32xf32, #tpu.memory_space<vmem>>, vector<1x100x32xf32>,
    return
  }
  func.func @transform_0(%arg0: i32) -> (i32, i32, i32) {
    %c0_i32 = arith.constant 0 : i32
    %c0_i32_0 = arith.constant 0 : i32
    %c0_i32_1 = arith.constant 0 : i32
    return %arg0, %c0_i32, %c0_i32_0 : i32, i32, i32
  }
  func.func @transform_1(%arg0: i32) -> (i32, i32) {
    %c0_i32 = arith.constant 0 : i32
    %c0_i32_0 = arith.constant 0 : i32
    %c0_i32_1 = arith.constant 0 : i32
    return %c0_i32, %c0_i32_0 : i32, i32
  }
  func.func @transform_2(%arg0: i32) -> (i32, i32) {
    %c0_i32 = arith.constant 0 : i32
    %c0_i32_0 = arith.constant 0 : i32
    %c0_i32_1 = arith.constant 0 : i32
    return %c0_i32, %c0_i32_0 : i32, i32
  }
  func.func @transform_3(%arg0: i32) -> (i32, i32) {
    %c0_i32 = arith.constant 0 : i32
    %c0_i32_0 = arith.constant 0 : i32
    %c0_i32_1 = arith.constant 0 : i32
    return %c0_i32, %c0_i32_0 : i32, i32
  }
  func.func @transform_4(%arg0: i32) -> (i32, i32, i32) {
    %c0_i32 = arith.constant 0 : i32
    %c0_i32_0 = arith.constant 0 : i32
    %c0_i32_1 = arith.constant 0 : i32
    %c0_i32_2 = arith.constant 0 : i32
    return %c0_i32, %c0_i32_0, %c0_i32_1 : i32, i32, i32
  }
  func.func @transform_5(%arg0: i32) -> (i32, i32) {
    %c0_i32 = arith.constant 0 : i32
    %c0_i32_0 = arith.constant 0 : i32
    %c0_i32_1 = arith.constant 0 : i32
    return %c0_i32, %c0_i32_0 : i32, i32
  }
  func.func @transform_6(%arg0: i32) -> (i32, i32, i32) {
    %c0_i32 = arith.constant 0 : i32
    %c0_i32_0 = arith.constant 0 : i32
    %c0_i32_1 = arith.constant 0 : i32
    return %arg0, %c0_i32, %c0_i32_0 : i32, i32, i32
  }
}

</mosaic_0001>

<llo_original>
// kernel: tpu_custom_call.1
$region0: #{tpu_custom_call.1}
  #allocation0 [shape = 'u32[]', space=smem, size = 0x4, offset = 0x4, fixed_abs, tag = 'smem constant byte address 0x4 - core index']
  #allocation1 [shape = 'u32[144,128]{1,0:T(1,128)}', space=vmem, size = 0x12000, scoped, tag = 'internal scratch']
  #allocation2 [shape = 'f32[256,32]{1,0:T(8,128)}', space=vmem, size = 0x20000, scoped, tag = 'scratch operand']
  #allocation3 [shape = 'f32[122,32]{1,0:T(8,128)}', space=vmem, size = 0x10000, scoped, tag = 'scratch operand']
  %s0 = inlined_call_operand.vmem [shape: f32[2,256,32], index: 0, kind: input, shape index: {}]
  %s1 = inlined_call_operand.vmem [shape: f32[32,32], index: 1, kind: input, shape index: {}]
  %s2 = inlined_call_operand.vmem [shape: f32[1,32], index: 2, kind: input, shape index: {}]
  %s3 = inlined_call_operand.vmem [shape: f32[122,256], index: 3, kind: input, shape index: {}]
  %s4 = inlined_call_operand.vmem [shape: f32[9,32,32], index: 4, kind: input, shape index: {}]
  %s5 = inlined_call_operand.vmem [shape: f32[1,32], index: 5, kind: input, shape index: {}]
  %s6 = inlined_call_operand.vmem [shape: f32[2,100,32], index: 6, kind: output, shape index: {}]
  %s7 = sld [smem:[#allocation0]]
  $region57: #{tpu_custom_call.1} parent=0
    _
  %s9 = ssub.s32 1, %s7
  %s10 = scalar_select 0, %s9, %s7
  loop: start=0, step=1, limit=4
  $region2: #{tpu_custom_call.1} parent=0 // loop_pre_header
    _
  $region3: #{tpu_custom_call.1} parent=0 // loop_header
    %s12 = sphi 0, %s16
    %p13 = scmp.ge.s32.totalorder %s12, 4
    %s22 = sphi 0, %s24
    %s25 = sphi 0, %s22
    %s26 = sphi 0, %s25
    %s42 = sphi 0, %s26
    %s46 = sphi 0, %s46
    %s48 = sphi 0, %s46
    %s49 = sphi 0, %s48
    %s63 = sphi 0, %s49
    %s67 = sphi 0, %s67
    %s69 = sphi 0, %s67
    %s70 = sphi 0, %s69
    %s84 = sphi 0, %s70
    %s88 = sphi 0, %s88
    %s90 = sphi 0, %s88
    %s91 = sphi 0, %s90
    %s105 = sphi 0, %s91
    %s109 = sphi 0, %s109
    %s111 = sphi 0, %s109
    %s112 = sphi 0, %s111
    %s126 = sphi 0, %s112
    %s130 = sphi 0, %s130
    %s132 = sphi 0, %s130
    %s133 = sphi 0, %s132
    %s147 = sphi 0, %s133
    %s153 = sphi 0, %s155
    %s156 = sphi 0, %s153
    %s157 = sphi 0, %s156
    %s173 = sphi 0, %s157
  $region4: #{tpu_custom_call.1} parent=0 // loop_header_branch
    %15 = sbr.rel (%p13) target = $region8
  $region5: #{tpu_custom_call.1} parent=0 // loop_body
    %s17 = ssub.s32 %s12, 1
    %s18 = ssub.s32 %s12, 2
    %s19 = sadd.s32 %s12, 1
    %s20 = ssub.s32 %s12, %s19
    %p21 = scmp.eq.s32.totalorder %s20, 0
    %s23 = sadd.s32 %s22, 1
    %s24 = scalar_select %p21, %s22, %s23
    %p27 = pneg %p21
    %p28 = scmp.eq.s32.totalorder %s12, 1
    %p29 = por %p27, %p28
    %p30 = scmp.ne.s32.totalorder %s22, %s25
    %p31 = scmp.eq.s32.totalorder %s12, 0
    %p32 = por %p30, %p31
    %p33 = scmp.ne.s32.totalorder %s22, %s25
    %p34 = scmp.eq.s32.totalorder %s17, 1
    %p35 = por %p33, %p34
    %p36 = scmp.ne.s32.totalorder %s25, %s26
    %p37 = scmp.eq.s32.totalorder %s17, 0
    %p38 = por %p36, %p37
    %p39 = scmp.ne.s32.totalorder %s25, %s26
    %p40 = scmp.eq.s32.totalorder %s18, 1
    %p41 = por %p39, %p40
    %p43 = scmp.ne.s32.totalorder %s26, %s42
    %p44 = scmp.eq.s32.totalorder %s18, 0
    %p45 = por %p43, %p44
    %s47 = sadd.s32 %s46, 1
    %p50 = scmp.eq.s32.totalorder %s12, 1
    %p51 = scmp.ne.s32.totalorder %s46, %s48
    %p52 = scmp.eq.s32.totalorder %s12, 0
    %p53 = por %p51, %p52
    %p54 = scmp.ne.s32.totalorder %s46, %s48
    %p55 = scmp.eq.s32.totalorder %s17, 1
    %p56 = por %p54, %p55
    %p57 = scmp.ne.s32.totalorder %s48, %s49
    %p58 = scmp.eq.s32.totalorder %s17, 0
    %p59 = por %p57, %p58
    %p60 = scmp.ne.s32.totalorder %s48, %s49
    %p61 = scmp.eq.s32.totalorder %s18, 1
    %p62 = por %p60, %p61
    %p64 = scmp.ne.s32.totalorder %s49, %s63
    %p65 = scmp.eq.s32.totalorder %s18, 0
    %p66 = por %p64, %p65
    %s68 = sadd.s32 %s67, 1
    %p71 = scmp.eq.s32.totalorder %s12, 1
    %p72 = scmp.ne.s32.totalorder %s67, %s69
    %p73 = scmp.eq.s32.totalorder %s12, 0
    %p74 = por %p72, %p73
    %p75 = scmp.ne.s32.totalorder %s67, %s69
    %p76 = scmp.eq.s32.totalorder %s17, 1
    %p77 = por %p75, %p76
    %p78 = scmp.ne.s32.totalorder %s69, %s70
    %p79 = scmp.eq.s32.totalorder %s17, 0
    %p80 = por %p78, %p79
    %p81 = scmp.ne.s32.totalorder %s69, %s70
    %p82 = scmp.eq.s32.totalorder %s18, 1
    %p83 = por %p81, %p82
    %p85 = scmp.ne.s32.totalorder %s70, %s84
    %p86 = scmp.eq.s32.totalorder %s18, 0
    %p87 = por %p85, %p86
    %s89 = sadd.s32 %s88, 1
    %p92 = scmp.eq.s32.totalorder %s12, 1
    %p93 = scmp.ne.s32.totalorder %s88, %s90
    %p94 = scmp.eq.s32.totalorder %s12, 0
    %p95 = por %p93, %p94
    %p96 = scmp.ne.s32.totalorder %s88, %s90
    %p97 = scmp.eq.s32.totalorder %s17, 1
    %p98 = por %p96, %p97
    %p99 = scmp.ne.s32.totalorder %s90, %s91
    %p100 = scmp.eq.s32.totalorder %s17, 0
    %p101 = por %p99, %p100
    %p102 = scmp.ne.s32.totalorder %s90, %s91
    %p103 = scmp.eq.s32.totalorder %s18, 1
    %p104 = por %p102, %p103
    %p106 = scmp.ne.s32.totalorder %s91, %s105
    %p107 = scmp.eq.s32.totalorder %s18, 0
    %p108 = por %p106, %p107
    %s110 = sadd.s32 %s109, 1
    %p113 = scmp.eq.s32.totalorder %s12, 1
    %p114 = scmp.ne.s32.totalorder %s109, %s111
    %p115 = scmp.eq.s32.totalorder %s12, 0
    %p116 = por %p114, %p115
    %p117 = scmp.ne.s32.totalorder %s109, %s111
    %p118 = scmp.eq.s32.totalorder %s17, 1
    %p119 = por %p117, %p118
    %p120 = scmp.ne.s32.totalorder %s111, %s112
    %p121 = scmp.eq.s32.totalorder %s17, 0
    %p122 = por %p120, %p121
    %p123 = scmp.ne.s32.totalorder %s111, %s112
    %p124 = scmp.eq.s32.totalorder %s18, 1
    %p125 = por %p123, %p124
    %p127 = scmp.ne.s32.totalorder %s112, %s126
    %p128 = scmp.eq.s32.totalorder %s18, 0
    %p129 = por %p127, %p128
    %s131 = sadd.s32 %s130, 1
    %p134 = scmp.eq.s32.totalorder %s12, 1
    %p135 = scmp.ne.s32.totalorder %s130, %s132
    %p136 = scmp.eq.s32.totalorder %s12, 0
    %p137 = por %p135, %p136
    %p138 = scmp.ne.s32.totalorder %s130, %s132
    %p139 = scmp.eq.s32.totalorder %s17, 1
    %p140 = por %p138, %p139
    %p141 = scmp.ne.s32.totalorder %s132, %s133
    %p142 = scmp.eq.s32.totalorder %s17, 0
    %p143 = por %p141, %p142
    %p144 = scmp.ne.s32.totalorder %s132, %s133
    %p145 = scmp.eq.s32.totalorder %s18, 1
    %p146 = por %p144, %p145
    %p148 = scmp.ne.s32.totalorder %s133, %s147
    %p149 = scmp.eq.s32.totalorder %s18, 0
    %p150 = por %p148, %p149
    %s151 = ssub.s32 %s12, %s19
    %p152 = scmp.eq.s32.totalorder %s151, 0
    %s154 = sadd.s32 %s153, 1
    %s155 = scalar_select %p152, %s153, %s154
    %p158 = pneg %p152
    %p159 = scmp.eq.s32.totalorder %s12, 1
    %p160 = por %p158, %p159
    %p161 = scmp.ne.s32.totalorder %s153, %s156
    %p162 = scmp.eq.s32.totalorder %s12, 0
    %p163 = por %p161, %p162
    %p164 = scmp.ne.s32.totalorder %s153, %s156
    %p165 = scmp.eq.s32.totalorder %s17, 1
    %p166 = por %p164, %p165
    %p167 = scmp.ne.s32.totalorder %s156, %s157
    %p168 = scmp.eq.s32.totalorder %s17, 0
    %p169 = por %p167, %p168
    %p170 = scmp.ne.s32.totalorder %s156, %s157
    %p171 = scmp.eq.s32.totalorder %s18, 1
    %p172 = por %p170, %p171
    %p174 = scmp.ne.s32.totalorder %s157, %s173
    %p175 = scmp.eq.s32.totalorder %s18, 0
    %p176 = por %p174, %p175
    %p177 = scmp.le.s32.totalorder 1, %s12
    %p178 = scmp.lt.s32.totalorder %s12, 3
    %p179 = pnand %p177, %p178
    %p180 = pneg %p179
    // Predicated region
    $region9: #{tpu_custom_call.1} parent=5 // pred_check
      _
    $region10: #{tpu_custom_call.1} parent=5 // pred_check_branch
      %182 = sbr.rel (%p179) target = $region12
    $region11: #{tpu_custom_call.1} parent=5 // pred_region
      %s183 = ssub.s32 %s12, 1
      // Predicated region
      $region13: #{tpu_custom_call.1} parent=11 // pred_check
        %p184 = pneg %p59
      $region14: #{tpu_custom_call.1} parent=11 // pred_check_branch
        %186 = sbr.rel (%p184) target = $region16
      $region15: #{tpu_custom_call.1} parent=11 // pred_region
        _
      $region16: #{tpu_custom_call.1} parent=11 // pred_fallthru
        _
      // Predicated region
      $region17: #{tpu_custom_call.1} parent=11 // pred_check
        %p187 = pneg %p80
      $region18: #{tpu_custom_call.1} parent=11 // pred_check_branch
        %189 = sbr.rel (%p187) target = $region20
      $region19: #{tpu_custom_call.1} parent=11 // pred_region
        _
      $region20: #{tpu_custom_call.1} parent=11 // pred_fallthru
        _
      // Predicated region
      $region21: #{tpu_custom_call.1} parent=11 // pred_check
        %p190 = pneg %p101
      $region22: #{tpu_custom_call.1} parent=11 // pred_check_branch
        %192 = sbr.rel (%p190) target = $region24
      $region23: #{tpu_custom_call.1} parent=11 // pred_region
        _
      $region24: #{tpu_custom_call.1} parent=11 // pred_fallthru
        _
      // Predicated region
      $region25: #{tpu_custom_call.1} parent=11 // pred_check
        %p193 = pneg %p122
      $region26: #{tpu_custom_call.1} parent=11 // pred_check_branch
        %195 = sbr.rel (%p193) target = $region28
      $region27: #{tpu_custom_call.1} parent=11 // pred_region
        _
      $region28: #{tpu_custom_call.1} parent=11 // pred_fallthru
        _
      // Predicated region
      $region29: #{tpu_custom_call.1} parent=11 // pred_check
        %p196 = pneg %p143
      $region30: #{tpu_custom_call.1} parent=11 // pred_check_branch
        %198 = sbr.rel (%p196) target = $region32
      $region31: #{tpu_custom_call.1} parent=11 // pred_region
        _
      $region32: #{tpu_custom_call.1} parent=11 // pred_fallthru
        _
    $region12: #{tpu_custom_call.1} parent=5 // pred_fallthru
      _
    %p199 = scmp.lt.s32.totalorder %s12, 2
    // Predicated region
    $region33: #{tpu_custom_call.1} parent=5 // pred_check
      %p200 = pneg %p199
    $region34: #{tpu_custom_call.1} parent=5 // pred_check_branch
      %202 = sbr.rel (%p200) target = $region36
    $region35: #{tpu_custom_call.1} parent=5 // pred_region
      // Predicated region
      $region37: #{tpu_custom_call.1} parent=35 // pred_check
        %p203 = pneg %p32
      $region38: #{tpu_custom_call.1} parent=35 // pred_check_branch
        %205 = sbr.rel (%p203) target = $region40
      $region39: #{tpu_custom_call.1} parent=35 // pred_region
        %p206 = scmp.lt.s32.totalorder %s12, 1
        %s207 = scalar_select %p206, %s12, 1
        %s208 = smul.addr %s207, 32
        %s209 = smul.addr %s208, 8
        %s210 = scalar_lea.vmem %s0, %s209
      $region40: #{tpu_custom_call.1} parent=35 // pred_fallthru
        _
    $region36: #{tpu_custom_call.1} parent=5 // pred_fallthru
      _
    %p211 = scmp.le.s32.totalorder 1, %s12
    %p212 = scmp.lt.s32.totalorder %s12, 3
    %p213 = pnand %p211, %p212
    %p214 = pneg %p213
    // Predicated region
    $region41: #{tpu_custom_call.1} parent=5 // pred_check
      _
    $region42: #{tpu_custom_call.1} parent=5 // pred_check_branch
      %216 = sbr.rel (%p213) target = $region44
    $region43: #{tpu_custom_call.1} parent=5 // pred_region
      %s217 = ssub.s32 %s12, 1
      %p218 = scmp.lt.s32.totalorder %s17, 1
      %s219 = scalar_select %p218, %s17, 1
      %s220 = smul.addr %s219, 32
      %s221 = smul.addr %s220, 8
      %s222 = scalar_lea.vmem %s0, %s221
      %p223 = pneg %p38
      %p224 = pneg %p35
      %p225 = pneg %p59
      %p226 = pneg %p56
      %p227 = pneg %p80
      %p228 = pneg %p77
      %p229 = pneg %p101
      %p230 = pneg %p98
      %p231 = pneg %p122
      %p232 = pneg %p119
      %p233 = pneg %p143
      %p234 = pneg %p140
      %p235 = pneg %p169
      %p236 = pneg %p166
      %p237 = scmp.lt.s32.totalorder %s17, 1
      %s238 = scalar_select %p237, %s17, 1
      %s239 = smul.addr %s238, 13
      %s240 = smul.addr %s239, 8
      %s241 = scalar_lea.vmem %s6, %s240
      %p242 = scmp.lt.s32.totalorder %s17, 1
      %s243 = scalar_select %p242, %s17, 1
      %s244 = smul.addr %s243, 32
      %s245 = smul.addr %s244, 8
      %s246 = scalar_lea.vmem %s0, %s245
      %p247 = scmp.lt.s32.totalorder %s17, 1
      %s248 = scalar_select %p247, %s17, 1
      %s249 = smul.addr %s248, 13
      %s250 = smul.addr %s249, 8
      %s251 = scalar_lea.vmem %s6, %s250
      %v252 = vld [vmem:[%s246] sm:$0xff]
      %v253 = vld [vmem:[%s246 + $0x8] sm:$0xff]
      %v254 = vld [vmem:[%s246 + $0x10] sm:$0xff]
      %v255 = vld [vmem:[%s246 + $0x18] sm:$0xff]
      %v256 = vld [vmem:[%s246 + $0x20] sm:$0xff]
      %v257 = vld [vmem:[%s246 + $0x28] sm:$0xff]
      %v258 = vld [vmem:[%s246 + $0x30] sm:$0xff]
      %v259 = vld [vmem:[%s246 + $0x38] sm:$0xff]
      %v260 = vld [vmem:[%s246 + $0x40] sm:$0xff]
      %v261 = vld [vmem:[%s246 + $0x48] sm:$0xff]
      %v262 = vld [vmem:[%s246 + $0x50] sm:$0xff]
      %v263 = vld [vmem:[%s246 + $0x58] sm:$0xff]
      %v264 = vld [vmem:[%s246 + $0x60] sm:$0xff]
      %v265 = vld [vmem:[%s246 + $0x68] sm:$0xff]
      %v266 = vld [vmem:[%s246 + $0x70] sm:$0xff]
      %v267 = vld [vmem:[%s246 + $0x78] sm:$0xff]
      %v268 = vld [vmem:[%s246 + $0x80] sm:$0xff]
      %v269 = vld [vmem:[%s246 + $0x88] sm:$0xff]
      %v270 = vld [vmem:[%s246 + $0x90] sm:$0xff]
      %v271 = vld [vmem:[%s246 + $0x98] sm:$0xff]
      %v272 = vld [vmem:[%s246 + $0xa0] sm:$0xff]
      %v273 = vld [vmem:[%s246 + $0xa8] sm:$0xff]
      %v274 = vld [vmem:[%s246 + $0xb0] sm:$0xff]
      %v275 = vld [vmem:[%s246 + $0xb8] sm:$0xff]
      %v276 = vld [vmem:[%s246 + $0xc0] sm:$0xff]
      %v277 = vld [vmem:[%s246 + $0xc8] sm:$0xff]
      %v278 = vld [vmem:[%s246 + $0xd0] sm:$0xff]
      %v279 = vld [vmem:[%s246 + $0xd8] sm:$0xff]
      %v280 = vld [vmem:[%s246 + $0xe0] sm:$0xff]
      %v281 = vld [vmem:[%s246 + $0xe8] sm:$0xff]
      %v282 = vld [vmem:[%s246 + $0xf0] sm:$0xff]
      %v283 = vld [vmem:[%s246 + $0xf8] sm:$0xff]
      %v284 = vld [vmem:[%s1] sm:$0xff]
      %v285 = vld [vmem:[%s1 + $0x8] sm:$0xff]
      %v286 = vld [vmem:[%s1 + $0x10] sm:$0xff]
      %v287 = vld [vmem:[%s1 + $0x18] sm:$0xff]
      %v288 = vld [vmem:[%s2] sm:$0x1]
      %v290 = vlaneseq
      %v291 = vshrl.u32 %v290, 7
      %v292 = vsub.s32 0, %v291
      %v293 = vrot.slane %v288, %v292
      %vm295 = vcmask 261120
      %v297 = vsel %vm295, %v252, 0
      %v300 = vsel %vm295, %v253, 0
      %v303 = vsel %vm295, %v254, 0
      %v306 = vsel %vm295, %v255, 0
      %v309 = vsel %vm295, %v256, 0
      %v312 = vsel %vm295, %v257, 0
      %v315 = vsel %vm295, %v258, 0
      %v318 = vsel %vm295, %v259, 0
      %v321 = vsel %vm295, %v260, 0
      %v324 = vsel %vm295, %v261, 0
      %v327 = vsel %vm295, %v262, 0
      %v330 = vsel %vm295, %v263, 0
      %v333 = vsel %vm295, %v264, 0
      %v336 = vsel %vm295, %v265, 0
      %v339 = vsel %vm295, %v266, 0
      %v342 = vsel %vm295, %v267, 0
      %v345 = vsel %vm295, %v268, 0
      %v348 = vsel %vm295, %v269, 0
      %v351 = vsel %vm295, %v270, 0
      %v354 = vsel %vm295, %v271, 0
      %v357 = vsel %vm295, %v272, 0
      %v360 = vsel %vm295, %v273, 0
      %v363 = vsel %vm295, %v274, 0
      %v366 = vsel %vm295, %v275, 0
      %v369 = vsel %vm295, %v276, 0
      %v372 = vsel %vm295, %v277, 0
      %v375 = vsel %vm295, %v278, 0
      %v378 = vsel %vm295, %v279, 0
      %v381 = vsel %vm295, %v280, 0
      %v384 = vsel %vm295, %v281, 0
      %v387 = vsel %vm295, %v282, 0
      %v390 = vsel %vm295, %v283, 0
      %392 = vmatprep.subr.mxu0 0.0
      %393 = vmatpush1.msra.mxu0 %v284
      %394 = vmatprep.subr.mxu0 0.0
      %395 = vmatpush1.msra.mxu0 %v285
      %396 = vmatprep.subr.mxu0 0.0
      %397 = vmatpush1.msra.mxu0 %v286
      %398 = vmatprep.subr.mxu0 0.0
      %399 = vmatpush1.msra.mxu0 %v287
      %400 = vmatprep.subr.mxu0 0.0
      %401 = vmatpush1.msra.mxu0 0.0
      %402 = vmatprep.subr.mxu0 0.0
      %403 = vmatpush1.msra.mxu0 0.0
      %404 = vmatprep.subr.mxu0 0.0
      %405 = vmatpush1.msra.mxu0 0.0
      %406 = vmatprep.subr.mxu0 0.0
      %407 = vmatpush1.msra.mxu0 0.0
      %408 = vmatprep.subr.mxu0 0.0
      %409 = vmatpush1.msra.mxu0 0.0
      %410 = vmatprep.subr.mxu0 0.0
      %411 = vmatpush1.msra.mxu0 0.0
      %412 = vmatprep.subr.mxu0 0.0
      %413 = vmatpush1.msra.mxu0 0.0
      %414 = vmatprep.subr.mxu0 0.0
      %415 = vmatpush1.msra.mxu0 0.0
      %416 = vmatprep.subr.mxu0 0.0
      %417 = vmatpush1.msra.mxu0 0.0
      %418 = vmatprep.subr.mxu0 0.0
      %419 = vmatpush1.msra.mxu0 0.0
      %420 = vmatprep.subr.mxu0 0.0
      %421 = vmatpush1.msra.mxu0 0.0
      %422 = vmatprep.subr.mxu0 0.0
      %423 = vmatpush1.msra.mxu0 0.0
      %424 = vmatprep.subr.mxu0 0.0
      %425 = vmatpush1.msra.mxu0 0.0
      %426 = vmatprep.subr.mxu0 0.0
      %427 = vmatpush1.msra.mxu0 0.0
      %428 = vmatprep.subr.mxu0 0.0
      %429 = vmatpush1.msra.mxu0 0.0
      %430 = vmatprep.subr.mxu0 0.0
      %431 = vmatpush1.msra.mxu0 0.0
      %432 = vmatprep.subr.mxu0 0.0
      %433 = vmatpush1.msra.mxu0 0.0
      %434 = vmatprep.subr.mxu0 0.0
      %435 = vmatpush1.msra.mxu0 0.0
      %436 = vmatprep.subr.mxu0 0.0
      %437 = vmatpush1.msra.mxu0 0.0
      %438 = vmatprep.subr.mxu0 0.0
      %439 = vmatpush1.msra.mxu0 0.0
      %440 = vmatprep.subr.mxu0 0.0
      %441 = vmatpush1.msra.mxu0 0.0
      %442 = vmatprep.subr.mxu0 0.0
      %443 = vmatpush1.msra.mxu0 0.0
      %444 = vmatprep.subr.mxu0 0.0
      %445 = vmatpush1.msra.mxu0 0.0
      %446 = vmatprep.subr.mxu0 0.0
      %447 = vmatpush1.msra.mxu0 0.0
      %448 = vmatprep.subr.mxu0 0.0
      %449 = vmatpush1.msra.mxu0 0.0
      %450 = vmatprep.subr.mxu0 0.0
      %451 = vmatpush1.msra.mxu0 0.0
      %452 = vmatprep.subr.mxu0 0.0
      %453 = vmatpush1.msra.mxu0 0.0
      %454 = vmatprep.subr.mxu0 0.0
      %455 = vmatpush1.msra.mxu0 0.0
      %456 = vmatprep.mubr.f32.mxu0 0.0
      %457 = vmatmul.mubr.f32.gmra.mrb[0].mxu0 %v297
      %v458 = vpop.f32.mrb[0].mxu0
      %v459 = vadd.f32 %v293, %v458
      %v460 = vpop.f32.mrb[0].mxu0
      %461 = vmatprep.mubr.f32.mxu0 0.0
      %462 = vmatmul.mubr.f32.gmra.mrb[0].mxu0 %v300
      %v463 = vpop.f32.mrb[0].mxu0
      %v464 = vadd.f32 %v293, %v463
      %v465 = vpop.f32.mrb[0].mxu0
      %466 = vmatprep.mubr.f32.mxu0 0.0
      %467 = vmatmul.mubr.f32.gmra.mrb[0].mxu0 %v303
      %v468 = vpop.f32.mrb[0].mxu0
      %v469 = vadd.f32 %v293, %v468
      %v470 = vpop.f32.mrb[0].mxu0
      %471 = vmatprep.mubr.f32.mxu0 0.0
      %472 = vmatmul.mubr.f32.gmra.mrb[0].mxu0 %v306
      %v473 = vpop.f32.mrb[0].mxu0
      %v474 = vadd.f32 %v293, %v473
      %v475 = vpop.f32.mrb[0].mxu0
      %476 = vmatprep.mubr.f32.mxu0 0.0
      %477 = vmatmul.mubr.f32.gmra.mrb[0].mxu0 %v309
      %v478 = vpop.f32.mrb[0].mxu0
      %v479 = vadd.f32 %v293, %v478
      %v480 = vpop.f32.mrb[0].mxu0
      %481 = vmatprep.mubr.f32.mxu0 0.0
      %482 = vmatmul.mubr.f32.gmra.mrb[0].mxu0 %v312
      %v483 = vpop.f32.mrb[0].mxu0
      %v484 = vadd.f32 %v293, %v483
      %v485 = vpop.f32.mrb[0].mxu0
      %486 = vmatprep.mubr.f32.mxu0 0.0
      %487 = vmatmul.mubr.f32.gmra.mrb[0].mxu0 %v315
      %v488 = vpop.f32.mrb[0].mxu0
      %v489 = vadd.f32 %v293, %v488
      %v490 = vpop.f32.mrb[0].mxu0
      %491 = vmatprep.mubr.f32.mxu0 0.0
      %492 = vmatmul.mubr.f32.gmra.mrb[0].mxu0 %v318
      %v493 = vpop.f32.mrb[0].mxu0
      %v494 = vadd.f32 %v293, %v493
      %v495 = vpop.f32.mrb[0].mxu0
      %496 = vmatprep.mubr.f32.mxu0 0.0
      %497 = vmatmul.mubr.f32.gmra.mrb[0].mxu0 %v321
      %v498 = vpop.f32.mrb[0].mxu0
      %v499 = vadd.f32 %v293, %v498
      %v500 = vpop.f32.mrb[0].mxu0
      %501 = vmatprep.mubr.f32.mxu0 0.0
      %502 = vmatmul.mubr.f32.gmra.mrb[0].mxu0 %v324
      %v503 = vpop.f32.mrb[0].mxu0
      %v504 = vadd.f32 %v293, %v503
      %v505 = vpop.f32.mrb[0].mxu0
      %506 = vmatprep.mubr.f32.mxu0 0.0
      %507 = vmatmul.mubr.f32.gmra.mrb[0].mxu0 %v327
      %v508 = vpop.f32.mrb[0].mxu0
      %v509 = vadd.f32 %v293, %v508
      %v510 = vpop.f32.mrb[0].mxu0
      %511 = vmatprep.mubr.f32.mxu0 0.0
      %512 = vmatmul.mubr.f32.gmra.mrb[0].mxu0 %v330
      %v513 = vpop.f32.mrb[0].mxu0
      %v514 = vadd.f32 %v293, %v513
      %v515 = vpop.f32.mrb[0].mxu0
      %516 = vmatprep.mubr.f32.mxu0 0.0
      %517 = vmatmul.mubr.f32.gmra.mrb[0].mxu0 %v333
      %v518 = vpop.f32.mrb[0].mxu0
      %v519 = vadd.f32 %v293, %v518
      %v520 = vpop.f32.mrb[0].mxu0
      %521 = vmatprep.mubr.f32.mxu0 0.0
      %522 = vmatmul.mubr.f32.gmra.mrb[0].mxu0 %v336
      %v523 = vpop.f32.mrb[0].mxu0
      %v524 = vadd.f32 %v293, %v523
      %v525 = vpop.f32.mrb[0].mxu0
      %526 = vmatprep.mubr.f32.mxu0 0.0
      %527 = vmatmul.mubr.f32.gmra.mrb[0].mxu0 %v339
      %v528 = vpop.f32.mrb[0].mxu0
      %v529 = vadd.f32 %v293, %v528
      %v530 = vpop.f32.mrb[0].mxu0
      %531 = vmatprep.mubr.f32.mxu0 0.0
      %532 = vmatmul.mubr.f32.gmra.mrb[0].mxu0 %v342
      %v533 = vpop.f32.mrb[0].mxu0
      %v534 = vadd.f32 %v293, %v533
      %v535 = vpop.f32.mrb[0].mxu0
      %536 = vmatprep.mubr.f32.mxu0 0.0
      %537 = vmatmul.mubr.f32.gmra.mrb[0].mxu0 %v345
      %v538 = vpop.f32.mrb[0].mxu0
      %v539 = vadd.f32 %v293, %v538
      %v540 = vpop.f32.mrb[0].mxu0
      %541 = vmatprep.mubr.f32.mxu0 0.0
      %542 = vmatmul.mubr.f32.gmra.mrb[0].mxu0 %v348
      %v543 = vpop.f32.mrb[0].mxu0
      %v544 = vadd.f32 %v293, %v543
      %v545 = vpop.f32.mrb[0].mxu0
      %546 = vmatprep.mubr.f32.mxu0 0.0
      %547 = vmatmul.mubr.f32.gmra.mrb[0].mxu0 %v351
      %v548 = vpop.f32.mrb[0].mxu0
      %v549 = vadd.f32 %v293, %v548
      %v550 = vpop.f32.mrb[0].mxu0
      %551 = vmatprep.mubr.f32.mxu0 0.0
      %552 = vmatmul.mubr.f32.gmra.mrb[0].mxu0 %v354
      %v553 = vpop.f32.mrb[0].mxu0
      %v554 = vadd.f32 %v293, %v553
      %v555 = vpop.f32.mrb[0].mxu0
      %556 = vmatprep.mubr.f32.mxu0 0.0
      %557 = vmatmul.mubr.f32.gmra.mrb[0].mxu0 %v357
      %v558 = vpop.f32.mrb[0].mxu0
      %v559 = vadd.f32 %v293, %v558
      %v560 = vpop.f32.mrb[0].mxu0
      %561 = vmatprep.mubr.f32.mxu0 0.0
      %562 = vmatmul.mubr.f32.gmra.mrb[0].mxu0 %v360
      %v563 = vpop.f32.mrb[0].mxu0
      %v564 = vadd.f32 %v293, %v563
      %v565 = vpop.f32.mrb[0].mxu0
      %566 = vmatprep.mubr.f32.mxu0 0.0
      %567 = vmatmul.mubr.f32.gmra.mrb[0].mxu0 %v363
      %v568 = vpop.f32.mrb[0].mxu0
      %v569 = vadd.f32 %v293, %v568
      %v570 = vpop.f32.mrb[0].mxu0
      %571 = vmatprep.mubr.f32.mxu0 0.0
      %572 = vmatmul.mubr.f32.gmra.mrb[0].mxu0 %v366
      %v573 = vpop.f32.mrb[0].mxu0
      %v574 = vadd.f32 %v293, %v573
      %v575 = vpop.f32.mrb[0].mxu0
      %576 = vmatprep.mubr.f32.mxu0 0.0
      %577 = vmatmul.mubr.f32.gmra.mrb[0].mxu0 %v369
      %v578 = vpop.f32.mrb[0].mxu0
      %v579 = vadd.f32 %v293, %v578
      %v580 = vpop.f32.mrb[0].mxu0
      %581 = vmatprep.mubr.f32.mxu0 0.0
      %582 = vmatmul.mubr.f32.gmra.mrb[0].mxu0 %v372
      %v583 = vpop.f32.mrb[0].mxu0
      %v584 = vadd.f32 %v293, %v583
      %v585 = vpop.f32.mrb[0].mxu0
      %586 = vmatprep.mubr.f32.mxu0 0.0
      %587 = vmatmul.mubr.f32.gmra.mrb[0].mxu0 %v375
      %v588 = vpop.f32.mrb[0].mxu0
      %v589 = vadd.f32 %v293, %v588
      %v590 = vpop.f32.mrb[0].mxu0
      %591 = vmatprep.mubr.f32.mxu0 0.0
      %592 = vmatmul.mubr.f32.gmra.mrb[0].mxu0 %v378
      %v593 = vpop.f32.mrb[0].mxu0
      %v594 = vadd.f32 %v293, %v593
      %v595 = vpop.f32.mrb[0].mxu0
      %596 = vmatprep.mubr.f32.mxu0 0.0
      %597 = vmatmul.mubr.f32.gmra.mrb[0].mxu0 %v381
      %v598 = vpop.f32.mrb[0].mxu0
      %v599 = vadd.f32 %v293, %v598
      %v600 = vpop.f32.mrb[0].mxu0
      %601 = vmatprep.mubr.f32.mxu0 0.0
      %602 = vmatmul.mubr.f32.gmra.mrb[0].mxu0 %v384
      %v603 = vpop.f32.mrb[0].mxu0
      %v604 = vadd.f32 %v293, %v603
      %v605 = vpop.f32.mrb[0].mxu0
      %606 = vmatprep.mubr.f32.mxu0 0.0
      %607 = vmatmul.mubr.f32.gmra.mrb[0].mxu0 %v387
      %v608 = vpop.f32.mrb[0].mxu0
      %v609 = vadd.f32 %v293, %v608
      %v610 = vpop.f32.mrb[0].mxu0
      %611 = vmatprep.mubr.f32.mxu0 0.0
      %612 = vmatmul.mubr.f32.gmra.mrb[0].mxu0 %v390
      %v613 = vpop.f32.mrb[0].mxu0
      %v614 = vadd.f32 %v293, %v613
      %v615 = vpop.f32.mrb[0].mxu0
      %616 = vdwg.mxu0
      %v617 = vmax.f32 %v459, 0.0
      %v618 = vmax.f32 %v464, 0.0
      %v619 = vmax.f32 %v469, 0.0
      %v620 = vmax.f32 %v474, 0.0
      %v621 = vmax.f32 %v479, 0.0
      %v622 = vmax.f32 %v484, 0.0
      %v623 = vmax.f32 %v489, 0.0
      %v624 = vmax.f32 %v494, 0.0
      %v625 = vmax.f32 %v499, 0.0
      %v626 = vmax.f32 %v504, 0.0
      %v627 = vmax.f32 %v509, 0.0
      %v628 = vmax.f32 %v514, 0.0
      %v629 = vmax.f32 %v519, 0.0
      %v630 = vmax.f32 %v524, 0.0
      %v631 = vmax.f32 %v529, 0.0
      %v632 = vmax.f32 %v534, 0.0
      %v633 = vmax.f32 %v539, 0.0
      %v634 = vmax.f32 %v544, 0.0
      %v635 = vmax.f32 %v549, 0.0
      %v636 = vmax.f32 %v554, 0.0
      %v637 = vmax.f32 %v559, 0.0
      %v638 = vmax.f32 %v564, 0.0
      %v639 = vmax.f32 %v569, 0.0
      %v640 = vmax.f32 %v574, 0.0
      %v641 = vmax.f32 %v579, 0.0
      %v642 = vmax.f32 %v584, 0.0
      %v643 = vmax.f32 %v589, 0.0
      %v644 = vmax.f32 %v594, 0.0
      %v645 = vmax.f32 %v599, 0.0
      %v646 = vmax.f32 %v604, 0.0
      %v647 = vmax.f32 %v609, 0.0
      %v648 = vmax.f32 %v614, 0.0
      %649 = vst.msk [vmem:[#allocation2] sm:$0xff] %vm295, %v617
      %650 = vst.msk [vmem:[#allocation2 + $0x8] sm:$0xff] %vm295, %v618
      %651 = vst.msk [vmem:[#allocation2 + $0x10] sm:$0xff] %vm295, %v619
      %652 = vst.msk [vmem:[#allocation2 + $0x18] sm:$0xff] %vm295, %v620
      %653 = vst.msk [vmem:[#allocation2 + $0x20] sm:$0xff] %vm295, %v621
      %654 = vst.msk [vmem:[#allocation2 + $0x28] sm:$0xff] %vm295, %v622
      %655 = vst.msk [vmem:[#allocation2 + $0x30] sm:$0xff] %vm295, %v623
      %656 = vst.msk [vmem:[#allocation2 + $0x38] sm:$0xff] %vm295, %v624
      %657 = vst.msk [vmem:[#allocation2 + $0x40] sm:$0xff] %vm295, %v625
      %658 = vst.msk [vmem:[#allocation2 + $0x48] sm:$0xff] %vm295, %v626
      %659 = vst.msk [vmem:[#allocation2 + $0x50] sm:$0xff] %vm295, %v627
      %660 = vst.msk [vmem:[#allocation2 + $0x58] sm:$0xff] %vm295, %v628
      %661 = vst.msk [vmem:[#allocation2 + $0x60] sm:$0xff] %vm295, %v629
      %662 = vst.msk [vmem:[#allocation2 + $0x68] sm:$0xff] %vm295, %v630
      %663 = vst.msk [vmem:[#allocation2 + $0x70] sm:$0xff] %vm295, %v631
      %664 = vst.msk [vmem:[#allocation2 + $0x78] sm:$0xff] %vm295, %v632
      %665 = vst.msk [vmem:[#allocation2 + $0x80] sm:$0xff] %vm295, %v633
      %666 = vst.msk [vmem:[#allocation2 + $0x88] sm:$0xff] %vm295, %v634
      %667 = vst.msk [vmem:[#allocation2 + $0x90] sm:$0xff] %vm295, %v635
      %668 = vst.msk [vmem:[#allocation2 + $0x98] sm:$0xff] %vm295, %v636
      %669 = vst.msk [vmem:[#allocation2 + $0xa0] sm:$0xff] %vm295, %v637
      %670 = vst.msk [vmem:[#allocation2 + $0xa8] sm:$0xff] %vm295, %v638
      %671 = vst.msk [vmem:[#allocation2 + $0xb0] sm:$0xff] %vm295, %v639
      %672 = vst.msk [vmem:[#allocation2 + $0xb8] sm:$0xff] %vm295, %v640
      %673 = vst.msk [vmem:[#allocation2 + $0xc0] sm:$0xff] %vm295, %v641
      %674 = vst.msk [vmem:[#allocation2 + $0xc8] sm:$0xff] %vm295, %v642
      %675 = vst.msk [vmem:[#allocation2 + $0xd0] sm:$0xff] %vm295, %v643
      %676 = vst.msk [vmem:[#allocation2 + $0xd8] sm:$0xff] %vm295, %v644
      %677 = vst.msk [vmem:[#allocation2 + $0xe0] sm:$0xff] %vm295, %v645
      %678 = vst.msk [vmem:[#allocation2 + $0xe8] sm:$0xff] %vm295, %v646
      %679 = vst.msk [vmem:[#allocation2 + $0xf0] sm:$0xff] %vm295, %v647
      %680 = vst.msk [vmem:[#allocation2 + $0xf8] sm:$0xff] %vm295, %v648
      %v681 = vld [vmem:[%s3] sm:$0xff]
      %v682 = vld [vmem:[%s3 + $0x8] sm:$0xff]
      %v683 = vld [vmem:[%s3 + $0x10] sm:$0xff]
      %v684 = vld [vmem:[%s3 + $0x18] sm:$0xff]
      %v685 = vld [vmem:[%s3 + $0x20] sm:$0xff]
      %v686 = vld [vmem:[%s3 + $0x28] sm:$0xff]
      %v687 = vld [vmem:[%s3 + $0x30] sm:$0xff]
      %v688 = vld [vmem:[%s3 + $0x38] sm:$0xff]
      %v689 = vld [vmem:[%s3 + $0x40] sm:$0xff]
      %v690 = vld [vmem:[%s3 + $0x48] sm:$0xff]
      %v691 = vld [vmem:[%s3 + $0x50] sm:$0xff]
      %v692 = vld [vmem:[%s3 + $0x58] sm:$0xff]
      %v693 = vld [vmem:[%s3 + $0x60] sm:$0xff]
      %v694 = vld [vmem:[%s3 + $0x68] sm:$0xff]
      %v695 = vld [vmem:[%s3 + $0x70] sm:$0xff]
      %v696 = vld [vmem:[%s3 + $0x78] sm:$0xff]
      %v697 = vld [vmem:[%s3 + $0x80] sm:$0xff]
      %v698 = vld [vmem:[%s3 + $0x88] sm:$0xff]
      %v699 = vld [vmem:[%s3 + $0x90] sm:$0xff]
      %v700 = vld [vmem:[%s3 + $0x98] sm:$0xff]
      %v701 = vld [vmem:[%s3 + $0xa0] sm:$0xff]
      %v702 = vld [vmem:[%s3 + $0xa8] sm:$0xff]
      %v703 = vld [vmem:[%s3 + $0xb0] sm:$0xff]
      %v704 = vld [vmem:[%s3 + $0xb8] sm:$0xff]
      %v705 = vld [vmem:[%s3 + $0xc0] sm:$0xff]
      %v706 = vld [vmem:[%s3 + $0xc8] sm:$0xff]
      %v707 = vld [vmem:[%s3 + $0xd0] sm:$0xff]
      %v708 = vld [vmem:[%s3 + $0xd8] sm:$0xff]
      %v709 = vld [vmem:[%s3 + $0xe0] sm:$0xff]
      %v710 = vld [vmem:[%s3 + $0xe8] sm:$0xff]
      %v711 = vld [vmem:[%s3 + $0xf0] sm:$0x3]
      %v712 = vld [vmem:[%s3 + $0xf8] sm:$0x3]
      %v713 = vld [vmem:[#allocation2] sm:$0xff]
      %v714 = vld [vmem:[#allocation2 + $0x8] sm:$0xff]
      %v715 = vld [vmem:[#allocation2 + $0x10] sm:$0xff]
      %v716 = vld [vmem:[#allocation2 + $0x18] sm:$0xff]
      %v717 = vld [vmem:[#allocation2 + $0x20] sm:$0xff]
      %v718 = vld [vmem:[#allocation2 + $0x28] sm:$0xff]
      %v719 = vld [vmem:[#allocation2 + $0x30] sm:$0xff]
      %v720 = vld [vmem:[#allocation2 + $0x38] sm:$0xff]
      %v721 = vld [vmem:[#allocation2 + $0x40] sm:$0xff]
      %v722 = vld [vmem:[#allocation2 + $0x48] sm:$0xff]
      %v723 = vld [vmem:[#allocation2 + $0x50] sm:$0xff]
      %v724 = vld [vmem:[#allocation2 + $0x58] sm:$0xff]
      %v725 = vld [vmem:[#allocation2 + $0x60] sm:$0xff]
      %v726 = vld [vmem:[#allocation2 + $0x68] sm:$0xff]
      %v727 = vld [vmem:[#allocation2 + $0x70] sm:$0xff]
      %v728 = vld [vmem:[#allocation2 + $0x78] sm:$0xff]
      %v729 = vld [vmem:[#allocation2 + $0x80] sm:$0xff]
      %v730 = vld [vmem:[#allocation2 + $0x88] sm:$0xff]
      %v731 = vld [vmem:[#allocation2 + $0x90] sm:$0xff]
      %v732 = vld [vmem:[#allocation2 + $0x98] sm:$0xff]
      %v733 = vld [vmem:[#allocation2 + $0xa0] sm:$0xff]
      %v734 = vld [vmem:[#allocation2 + $0xa8] sm:$0xff]
      %v735 = vld [vmem:[#allocation2 + $0xb0] sm:$0xff]
      %v736 = vld [vmem:[#allocation2 + $0xb8] sm:$0xff]
      %v737 = vld [vmem:[#allocation2 + $0xc0] sm:$0xff]
      %v738 = vld [vmem:[#allocation2 + $0xc8] sm:$0xff]
      %v739 = vld [vmem:[#allocation2 + $0xd0] sm:$0xff]
      %v740 = vld [vmem:[#allocation2 + $0xd8] sm:$0xff]
      %v741 = vld [vmem:[#allocation2 + $0xe0] sm:$0xff]
      %v742 = vld [vmem:[#allocation2 + $0xe8] sm:$0xff]
      %v743 = vld [vmem:[#allocation2 + $0xf0] sm:$0xff]
      %v744 = vld [vmem:[#allocation2 + $0xf8] sm:$0xff]
      %745 = vmatprep.subr.mxu0 0.0
      %746 = vmatpush1.msra.mxu0 %v713
      %747 = vmatprep.subr.mxu0 0.0
      %748 = vmatpush1.msra.mxu0 %v714
      %749 = vmatprep.subr.mxu0 0.0
      %750 = vmatpush1.msra.mxu0 %v715
      %751 = vmatprep.subr.mxu0 0.0
      %752 = vmatpush1.msra.mxu0 %v716
      %753 = vmatprep.subr.mxu0 0.0
      %754 = vmatpush1.msra.mxu0 %v717
      %755 = vmatprep.subr.mxu0 0.0
      %756 = vmatpush1.msra.mxu0 %v718
      %757 = vmatprep.subr.mxu0 0.0
      %758 = vmatpush1.msra.mxu0 %v719
      %759 = vmatprep.subr.mxu0 0.0
      %760 = vmatpush1.msra.mxu0 %v720
      %761 = vmatprep.subr.mxu0 0.0
      %762 = vmatpush1.msra.mxu0 %v721
      %763 = vmatprep.subr.mxu0 0.0
      %764 = vmatpush1.msra.mxu0 %v722
      %765 = vmatprep.subr.mxu0 0.0
      %766 = vmatpush1.msra.mxu0 %v723
      %767 = vmatprep.subr.mxu0 0.0
      %768 = vmatpush1.msra.mxu0 %v724
      %769 = vmatprep.subr.mxu0 0.0
      %770 = vmatpush1.msra.mxu0 %v725
      %771 = vmatprep.subr.mxu0 0.0
      %772 = vmatpush1.msra.mxu0 %v726
      %773 = vmatprep.subr.mxu0 0.0
      %774 = vmatpush1.msra.mxu0 %v727
      %775 = vmatprep.subr.mxu0 0.0
      %776 = vmatpush1.msra.mxu0 %v728
      %777 = vmatprep.subr.mxu0 0.0
      %778 = vmatpush1.msra.mxu0 %v729
      %779 = vmatprep.subr.mxu0 0.0
      %780 = vmatpush1.msra.mxu0 %v730
      %781 = vmatprep.subr.mxu0 0.0
      %782 = vmatpush1.msra.mxu0 %v731
      %783 = vmatprep.subr.mxu0 0.0
      %784 = vmatpush1.msra.mxu0 %v732
      %785 = vmatprep.subr.mxu0 0.0
      %786 = vmatpush1.msra.mxu0 %v733
      %787 = vmatprep.subr.mxu0 0.0
      %788 = vmatpush1.msra.mxu0 %v734
      %789 = vmatprep.subr.mxu0 0.0
      %790 = vmatpush1.msra.mxu0 %v735
      %791 = vmatprep.subr.mxu0 0.0
      %792 = vmatpush1.msra.mxu0 %v736
      %793 = vmatprep.subr.mxu0 0.0
      %794 = vmatpush1.msra.mxu0 %v737
      %795 = vmatprep.subr.mxu0 0.0
      %796 = vmatpush1.msra.mxu0 %v738
      %797 = vmatprep.subr.mxu0 0.0
      %798 = vmatpush1.msra.mxu0 %v739
      %799 = vmatprep.subr.mxu0 0.0
      %800 = vmatpush1.msra.mxu0 %v740
      %801 = vmatprep.subr.mxu0 0.0
      %802 = vmatpush1.msra.mxu0 %v741
      %803 = vmatprep.subr.mxu0 0.0
      %804 = vmatpush1.msra.mxu0 %v742
      %805 = vmatprep.subr.mxu0 0.0
      %806 = vmatpush1.msra.mxu0 %v743
      %807 = vmatprep.subr.mxu0 0.0
      %808 = vmatpush1.msra.mxu0 %v744
      %809 = vmatprep.mubr.f32.mxu0 %v682
      %810 = vmatmul.mubr.f32.gmra.mrb[0].mxu0 %v681
      %v811 = vpop.f32.mrb[0].mxu0
      %v812 = vadd.f32 0.0, %v811
      %v813 = vpop.f32.mrb[0].mxu0
      %814 = vmatprep.mubr.f32.mxu0 %v684
      %815 = vmatmul.mubr.f32.gmra.mrb[0].mxu0 %v683
      %v816 = vpop.f32.mrb[0].mxu0
      %v817 = vadd.f32 0.0, %v816
      %v818 = vpop.f32.mrb[0].mxu0
      %819 = vmatprep.mubr.f32.mxu0 %v686
      %820 = vmatmul.mubr.f32.gmra.mrb[0].mxu0 %v685
      %v821 = vpop.f32.mrb[0].mxu0
      %v822 = vadd.f32 0.0, %v821
      %v823 = vpop.f32.mrb[0].mxu0
      %824 = vmatprep.mubr.f32.mxu0 %v688
      %825 = vmatmul.mubr.f32.gmra.mrb[0].mxu0 %v687
      %v826 = vpop.f32.mrb[0].mxu0
      %v827 = vadd.f32 0.0, %v826
      %v828 = vpop.f32.mrb[0].mxu0
      %829 = vmatprep.mubr.f32.mxu0 %v690
      %830 = vmatmul.mubr.f32.gmra.mrb[0].mxu0 %v689
      %v831 = vpop.f32.mrb[0].mxu0
      %v832 = vadd.f32 0.0, %v831
      %v833 = vpop.f32.mrb[0].mxu0
      %834 = vmatprep.mubr.f32.mxu0 %v692
      %835 = vmatmul.mubr.f32.gmra.mrb[0].mxu0 %v691
      %v836 = vpop.f32.mrb[0].mxu0
      %v837 = vadd.f32 0.0, %v836
      %v838 = vpop.f32.mrb[0].mxu0
      %839 = vmatprep.mubr.f32.mxu0 %v694
      %840 = vmatmul.mubr.f32.gmra.mrb[0].mxu0 %v693
      %v841 = vpop.f32.mrb[0].mxu0
      %v842 = vadd.f32 0.0, %v841
      %v843 = vpop.f32.mrb[0].mxu0
      %844 = vmatprep.mubr.f32.mxu0 %v696
      %845 = vmatmul.mubr.f32.gmra.mrb[0].mxu0 %v695
      %v846 = vpop.f32.mrb[0].mxu0
      %v847 = vadd.f32 0.0, %v846
      %v848 = vpop.f32.mrb[0].mxu0
      %849 = vmatprep.mubr.f32.mxu0 %v698
      %850 = vmatmul.mubr.f32.gmra.mrb[0].mxu0 %v697
      %v851 = vpop.f32.mrb[0].mxu0
      %v852 = vadd.f32 0.0, %v851
      %v853 = vpop.f32.mrb[0].mxu0
      %854 = vmatprep.mubr.f32.mxu0 %v700
      %855 = vmatmul.mubr.f32.gmra.mrb[0].mxu0 %v699
      %v856 = vpop.f32.mrb[0].mxu0
      %v857 = vadd.f32 0.0, %v856
      %v858 = vpop.f32.mrb[0].mxu0
      %859 = vmatprep.mubr.f32.mxu0 %v702
      %860 = vmatmul.mubr.f32.gmra.mrb[0].mxu0 %v701
      %v861 = vpop.f32.mrb[0].mxu0
      %v862 = vadd.f32 0.0, %v861
      %v863 = vpop.f32.mrb[0].mxu0
      %864 = vmatprep.mubr.f32.mxu0 %v704
      %865 = vmatmul.mubr.f32.gmra.mrb[0].mxu0 %v703
      %v866 = vpop.f32.mrb[0].mxu0
      %v867 = vadd.f32 0.0, %v866
      %v868 = vpop.f32.mrb[0].mxu0
      %869 = vmatprep.mubr.f32.mxu0 %v706
      %870 = vmatmul.mubr.f32.gmra.mrb[0].mxu0 %v705
      %v871 = vpop.f32.mrb[0].mxu0
      %v872 = vadd.f32 0.0, %v871
      %v873 = vpop.f32.mrb[0].mxu0
      %874 = vmatprep.mubr.f32.mxu0 %v708
      %875 = vmatmul.mubr.f32.gmra.mrb[0].mxu0 %v707
      %v876 = vpop.f32.mrb[0].mxu0
      %v877 = vadd.f32 0.0, %v876
      %v878 = vpop.f32.mrb[0].mxu0
      %879 = vmatprep.mubr.f32.mxu0 %v710
      %880 = vmatmul.mubr.f32.gmra.mrb[0].mxu0 %v709
      %v881 = vpop.f32.mrb[0].mxu0
      %v882 = vadd.f32 0.0, %v881
      %v883 = vpop.f32.mrb[0].mxu0
      %884 = vmatprep.mubr.f32.mxu0 %v712
      %885 = vmatmul.mubr.f32.gmra.mrb[0].mxu0 %v711
      %v886 = vpop.f32.mrb[0].mxu0
      %v887 = vadd.f32 0.0, %v886
      %v888 = vpop.f32.mrb[0].mxu0
      %889 = vdwg.mxu0
      %890 = vst.msk [vmem:[#allocation3] sm:$0xff] %vm295, %v812
      %891 = vst.msk [vmem:[#allocation3 + $0x8] sm:$0xff] %vm295, %v817
      %892 = vst.msk [vmem:[#allocation3 + $0x10] sm:$0xff] %vm295, %v822
      %893 = vst.msk [vmem:[#allocation3 + $0x18] sm:$0xff] %vm295, %v827
      %894 = vst.msk [vmem:[#allocation3 + $0x20] sm:$0xff] %vm295, %v832
      %895 = vst.msk [vmem:[#allocation3 + $0x28] sm:$0xff] %vm295, %v837
      %896 = vst.msk [vmem:[#allocation3 + $0x30] sm:$0xff] %vm295, %v842
      %897 = vst.msk [vmem:[#allocation3 + $0x38] sm:$0xff] %vm295, %v847
      %898 = vst.msk [vmem:[#allocation3 + $0x40] sm:$0xff] %vm295, %v852
      %899 = vst.msk [vmem:[#allocation3 + $0x48] sm:$0xff] %vm295, %v857
      %900 = vst.msk [vmem:[#allocation3 + $0x50] sm:$0xff] %vm295, %v862
      %901 = vst.msk [vmem:[#allocation3 + $0x58] sm:$0xff] %vm295, %v867
      %902 = vst.msk [vmem:[#allocation3 + $0x60] sm:$0xff] %vm295, %v872
      %903 = vst.msk [vmem:[#allocation3 + $0x68] sm:$0xff] %vm295, %v877
      %904 = vst.msk [vmem:[#allocation3 + $0x70] sm:$0xff] %vm295, %v882
      %vm905 = vcmask 254976
      %906 = vst.msk [vmem:[#allocation3 + $0x78] sm:$0x3] %vm905, %v887
      %v907 = vld [vmem:[%s5] sm:$0x1]
      %v908 = vld [vmem:[#allocation3] sm:$0xff]
      %v909 = vld [vmem:[#allocation3 + $0x8] sm:$0xff]
      %v910 = vld [vmem:[#allocation3 + $0x10] sm:$0xff]
      %v911 = vld [vmem:[#allocation3 + $0x18] sm:$0xff]
      %v912 = vld [vmem:[#allocation3 + $0x20] sm:$0xff]
      %v913 = vld [vmem:[#allocation3 + $0x28] sm:$0xff]
      %v914 = vld [vmem:[#allocation3 + $0x30] sm:$0xff]
      %v915 = vld [vmem:[#allocation3 + $0x38] sm:$0xff]
      %v916 = vld [vmem:[#allocation3 + $0x40] sm:$0xff]
      %v917 = vld [vmem:[#allocation3 + $0x48] sm:$0xff]
      %v918 = vld [vmem:[#allocation3 + $0x50] sm:$0xff]
      %v919 = vld [vmem:[#allocation3 + $0x58] sm:$0xff]
      %v920 = vld [vmem:[#allocation3 + $0x60] sm:$0xf]
      %v921 = vld [vmem:[%s4] sm:$0xff]
      %v922 = vld [vmem:[%s4 + $0x8] sm:$0xff]
      %v923 = vld [vmem:[%s4 + $0x10] sm:$0xff]
      %v924 = vld [vmem:[%s4 + $0x18] sm:$0xff]
      %v925 = vld [vmem:[#allocation3 + $0x1] sm:$0xff]
      %v926 = vld [vmem:[#allocation3 + $0x9] sm:$0xff]
      %v927 = vld [vmem:[#allocation3 + $0x11] sm:$0xff]
      %v928 = vld [vmem:[#allocation3 + $0x19] sm:$0xff]
      %v929 = vld [vmem:[#allocation3 + $0x21] sm:$0xff]
      %v930 = vld [vmem:[#allocation3 + $0x29] sm:$0xff]
      %v931 = vld [vmem:[#allocation3 + $0x31] sm:$0xff]
      %v932 = vld [vmem:[#allocation3 + $0x39] sm:$0xff]
      %v933 = vld [vmem:[#allocation3 + $0x41] sm:$0xff]
      %v934 = vld [vmem:[#allocation3 + $0x49] sm:$0xff]
      %v935 = vld [vmem:[#allocation3 + $0x51] sm:$0xff]
      %v936 = vld [vmem:[#allocation3 + $0x59] sm:$0xff]
      %v937 = vld [vmem:[#allocation3 + $0x61] sm:$0xf]
      %s938 = scalar_lea.vmem %s4, 32
      %v939 = vld [vmem:[%s938] sm:$0xff]
      %v940 = vld [vmem:[%s938 + $0x8] sm:$0xff]
      %v941 = vld [vmem:[%s938 + $0x10] sm:$0xff]
      %v942 = vld [vmem:[%s938 + $0x18] sm:$0xff]
      %v944 = vsel %vm295, %v925, 0
      %v947 = vsel %vm295, %v926, 0
      %v950 = vsel %vm295, %v927, 0
      %v953 = vsel %vm295, %v928, 0
      %v956 = vsel %vm295, %v929, 0
      %v959 = vsel %vm295, %v930, 0
      %v962 = vsel %vm295, %v931, 0
      %v965 = vsel %vm295, %v932, 0
      %v968 = vsel %vm295, %v933, 0
      %v971 = vsel %vm295, %v934, 0
      %v974 = vsel %vm295, %v935, 0
      %v977 = vsel %vm295, %v936, 0
      %v980 = vsel %vm295, %v937, 0
      %982 = vmatprep.subr.mxu0 0.0
      %983 = vmatpush1.msra.mxu0 %v939
      %984 = vmatprep.subr.mxu0 0.0
      %985 = vmatpush1.msra.mxu0 %v940
      %986 = vmatprep.subr.mxu0 0.0
      %987 = vmatpush1.msra.mxu0 %v941
      %988 = vmatprep.subr.mxu0 0.0
      %989 = vmatpush1.msra.mxu0 %v942
      %990 = vmatprep.subr.mxu0 0.0
      %991 = vmatpush1.msra.mxu0 0.0
      %992 = vmatprep.subr.mxu0 0.0
      %993 = vmatpush1.msra.mxu0 0.0
      %994 = vmatprep.subr.mxu0 0.0
      %995 = vmatpush1.msra.mxu0 0.0
      %996 = vmatprep.subr.mxu0 0.0
      %997 = vmatpush1.msra.mxu0 0.0
      %998 = vmatprep.subr.mxu0 0.0
      %999 = vmatpush1.msra.mxu0 0.0
      %1000 = vmatprep.subr.mxu0 0.0
      %1001 = vmatpush1.msra.mxu0 0.0
      %1002 = vmatprep.subr.mxu0 0.0
      %1003 = vmatpush1.msra.mxu0 0.0
      %1004 = vmatprep.subr.mxu0 0.0
      %1005 = vmatpush1.msra.mxu0 0.0
      %1006 = vmatprep.subr.mxu0 0.0
      %1007 = vmatpush1.msra.mxu0 0.0
      %1008 = vmatprep.subr.mxu0 0.0
      %1009 = vmatpush1.msra.mxu0 0.0
      %1010 = vmatprep.subr.mxu0 0.0
      %1011 = vmatpush1.msra.mxu0 0.0
      %1012 = vmatprep.subr.mxu0 0.0
      %1013 = vmatpush1.msra.mxu0 0.0
      %1014 = vmatprep.subr.mxu0 0.0
      %1015 = vmatpush1.msra.mxu0 0.0
      %1016 = vmatprep.subr.mxu0 0.0
      %1017 = vmatpush1.msra.mxu0 0.0
      %1018 = vmatprep.subr.mxu0 0.0
      %1019 = vmatpush1.msra.mxu0 0.0
      %1020 = vmatprep.subr.mxu0 0.0
      %1021 = vmatpush1.msra.mxu0 0.0
      %1022 = vmatprep.subr.mxu0 0.0
      %1023 = vmatpush1.msra.mxu0 0.0
      %1024 = vmatprep.subr.mxu0 0.0
      %1025 = vmatpush1.msra.mxu0 0.0
      %1026 = vmatprep.subr.mxu0 0.0
      %1027 = vmatpush1.msra.mxu0 0.0
      %1028 = vmatprep.subr.mxu0 0.0
      %1029 = vmatpush1.msra.mxu0 0.0
      %1030 = vmatprep.subr.mxu0 0.0
      %1031 = vmatpush1.msra.mxu0 0.0
      %1032 = vmatprep.subr.mxu0 0.0
      %1033 = vmatpush1.msra.mxu0 0.0
      %1034 = vmatprep.subr.mxu0 0.0
      %1035 = vmatpush1.msra.mxu0 0.0
      %1036 = vmatprep.subr.mxu0 0.0
      %1037 = vmatpush1.msra.mxu0 0.0
      %1038 = vmatprep.subr.mxu0 0.0
      %1039 = vmatpush1.msra.mxu0 0.0
      %1040 = vmatprep.subr.mxu0 0.0
      %1041 = vmatpush1.msra.mxu0 0.0
      %1042 = vmatprep.subr.mxu0 0.0
      %1043 = vmatpush1.msra.mxu0 0.0
      %1044 = vmatprep.subr.mxu0 0.0
      %1045 = vmatpush1.msra.mxu0 0.0
      %1046 = vmatprep.mubr.f32.mxu0 0.0
      %1047 = vmatmul.mubr.f32.gmra.mrb[0].mxu0 %v944
      %v1048 = vpop.f32.mrb[0].mxu0
      %v1049 = vadd.f32 0.0, %v1048
      %v1050 = vpop.f32.mrb[0].mxu0
      %1051 = vmatprep.mubr.f32.mxu0 0.0
      %1052 = vmatmul.mubr.f32.gmra.mrb[0].mxu0 %v947
      %v1053 = vpop.f32.mrb[0].mxu0
      %v1054 = vadd.f32 0.0, %v1053
      %v1055 = vpop.f32.mrb[0].mxu0
      %1056 = vmatprep.mubr.f32.mxu0 0.0
      %1057 = vmatmul.mubr.f32.gmra.mrb[0].mxu0 %v950
      %v1058 = vpop.f32.mrb[0].mxu0
      %v1059 = vadd.f32 0.0, %v1058
      %v1060 = vpop.f32.mrb[0].mxu0
      %1061 = vmatprep.mubr.f32.mxu0 0.0
      %1062 = vmatmul.mubr.f32.gmra.mrb[0].mxu0 %v953
      %v1063 = vpop.f32.mrb[0].mxu0
      %v1064 = vadd.f32 0.0, %v1063
      %v1065 = vpop.f32.mrb[0].mxu0
      %1066 = vmatprep.mubr.f32.mxu0 0.0
      %1067 = vmatmul.mubr.f32.gmra.mrb[0].mxu0 %v956
      %v1068 = vpop.f32.mrb[0].mxu0
      %v1069 = vadd.f32 0.0, %v1068
      %v1070 = vpop.f32.mrb[0].mxu0
      %1071 = vmatprep.mubr.f32.mxu0 0.0
      %1072 = vmatmul.mubr.f32.gmra.mrb[0].mxu0 %v959
      %v1073 = vpop.f32.mrb[0].mxu0
      %v1074 = vadd.f32 0.0, %v1073
      %v1075 = vpop.f32.mrb[0].mxu0
      %1076 = vmatprep.mubr.f32.mxu0 0.0
      %1077 = vmatmul.mubr.f32.gmra.mrb[0].mxu0 %v962
      %v1078 = vpop.f32.mrb[0].mxu0
      %v1079 = vadd.f32 0.0, %v1078
      %v1080 = vpop.f32.mrb[0].mxu0
      %1081 = vmatprep.mubr.f32.mxu0 0.0
      %1082 = vmatmul.mubr.f32.gmra.mrb[0].mxu0 %v965
      %v1083 = vpop.f32.mrb[0].mxu0
      %v1084 = vadd.f32 0.0, %v1083
      %v1085 = vpop.f32.mrb[0].mxu0
      %1086 = vmatprep.mubr.f32.mxu0 0.0
      %1087 = vmatmul.mubr.f32.gmra.mrb[0].mxu0 %v968
      %v1088 = vpop.f32.mrb[0].mxu0
      %v1089 = vadd.f32 0.0, %v1088
      %v1090 = vpop.f32.mrb[0].mxu0
      %1091 = vmatprep.mubr.f32.mxu0 0.0
      %1092 = vmatmul.mubr.f32.gmra.mrb[0].mxu0 %v971
      %v1093 = vpop.f32.mrb[0].mxu0
      %v1094 = vadd.f32 0.0, %v1093
      %v1095 = vpop.f32.mrb[0].mxu0
      %1096 = vmatprep.mubr.f32.mxu0 0.0
      %1097 = vmatmul.mubr.f32.gmra.mrb[0].mxu0 %v974
      %v1098 = vpop.f32.mrb[0].mxu0
      %v1099 = vadd.f32 0.0, %v1098
      %v1100 = vpop.f32.mrb[0].mxu0
      %1101 = vmatprep.mubr.f32.mxu0 0.0
      %1102 = vmatmul.mubr.f32.gmra.mrb[0].mxu0 %v977
      %v1103 = vpop.f32.mrb[0].mxu0
      %v1104 = vadd.f32 0.0, %v1103
      %v1105 = vpop.f32.mrb[0].mxu0
      %1106 = vmatprep.mubr.f32.mxu0 0.0
      %1107 = vmatmul.mubr.f32.gmra.mrb[0].mxu0 %v980
      %v1108 = vpop.f32.mrb[0].mxu0
      %v1109 = vadd.f32 0.0, %v1108
      %v1110 = vpop.f32.mrb[0].mxu0
      %1111 = vdwg.mxu0
      %v1113 = vsel %vm295, %v908, 0
      %v1116 = vsel %vm295, %v909, 0
      %v1119 = vsel %vm295, %v910, 0
      %v1122 = vsel %vm295, %v911, 0
      %v1125 = vsel %vm295, %v912, 0
      %v1128 = vsel %vm295, %v913, 0
      %v1131 = vsel %vm295, %v914, 0
      %v1134 = vsel %vm295, %v915, 0
      %v1137 = vsel %vm295, %v916, 0
      %v1140 = vsel %vm295, %v917, 0
      %v1143 = vsel %vm295, %v918, 0
      %v1146 = vsel %vm295, %v919, 0
      %v1149 = vsel %vm295, %v920, 0
      %1151 = vmatprep.subr.mxu0 0.0
      %1152 = vmatpush1.msra.mxu0 %v921
      %1153 = vmatprep.subr.mxu0 0.0
      %1154 = vmatpush1.msra.mxu0 %v922
      %1155 = vmatprep.subr.mxu0 0.0
      %1156 = vmatpush1.msra.mxu0 %v923
      %1157 = vmatprep.subr.mxu0 0.0
      %1158 = vmatpush1.msra.mxu0 %v924
      %1159 = vmatprep.subr.mxu0 0.0
      %1160 = vmatpush1.msra.mxu0 0.0
      %1161 = vmatprep.subr.mxu0 0.0
      %1162 = vmatpush1.msra.mxu0 0.0
      %1163 = vmatprep.subr.mxu0 0.0
      %1164 = vmatpush1.msra.mxu0 0.0
      %1165 = vmatprep.subr.mxu0 0.0
      %1166 = vmatpush1.msra.mxu0 0.0
      %1167 = vmatprep.subr.mxu0 0.0
      %1168 = vmatpush1.msra.mxu0 0.0
      %1169 = vmatprep.subr.mxu0 0.0
      %1170 = vmatpush1.msra.mxu0 0.0
      %1171 = vmatprep.subr.mxu0 0.0
      %1172 = vmatpush1.msra.mxu0 0.0
      %1173 = vmatprep.subr.mxu0 0.0
      %1174 = vmatpush1.msra.mxu0 0.0
      %1175 = vmatprep.subr.mxu0 0.0
      %1176 = vmatpush1.msra.mxu0 0.0
      %1177 = vmatprep.subr.mxu0 0.0
      %1178 = vmatpush1.msra.mxu0 0.0
      %1179 = vmatprep.subr.mxu0 0.0
      %1180 = vmatpush1.msra.mxu0 0.0
      %1181 = vmatprep.subr.mxu0 0.0
      %1182 = vmatpush1.msra.mxu0 0.0
      %1183 = vmatprep.subr.mxu0 0.0
      %1184 = vmatpush1.msra.mxu0 0.0
      %1185 = vmatprep.subr.mxu0 0.0
      %1186 = vmatpush1.msra.mxu0 0.0
      %1187 = vmatprep.subr.mxu0 0.0
      %1188 = vmatpush1.msra.mxu0 0.0
      %1189 = vmatprep.subr.mxu0 0.0
      %1190 = vmatpush1.msra.mxu0 0.0
      %1191 = vmatprep.subr.mxu0 0.0
      %1192 = vmatpush1.msra.mxu0 0.0
      %1193 = vmatprep.subr.mxu0 0.0
      %1194 = vmatpush1.msra.mxu0 0.0
      %1195 = vmatprep.subr.mxu0 0.0
      %1196 = vmatpush1.msra.mxu0 0.0
      %1197 = vmatprep.subr.mxu0 0.0
      %1198 = vmatpush1.msra.mxu0 0.0
      %1199 = vmatprep.subr.mxu0 0.0
      %1200 = vmatpush1.msra.mxu0 0.0
      %1201 = vmatprep.subr.mxu0 0.0
      %1202 = vmatpush1.msra.mxu0 0.0
      %1203 = vmatprep.subr.mxu0 0.0
      %1204 = vmatpush1.msra.mxu0 0.0
      %1205 = vmatprep.subr.mxu0 0.0
      %1206 = vmatpush1.msra.mxu0 0.0
      %1207 = vmatprep.subr.mxu0 0.0
      %1208 = vmatpush1.msra.mxu0 0.0
      %1209 = vmatprep.subr.mxu0 0.0
      %1210 = vmatpush1.msra.mxu0 0.0
      %1211 = vmatprep.subr.mxu0 0.0
      %1212 = vmatpush1.msra.mxu0 0.0
      %1213 = vmatprep.subr.mxu0 0.0
      %1214 = vmatpush1.msra.mxu0 0.0
      %1215 = vmatprep.mubr.f32.mxu0 0.0
      %1216 = vmatmul.mubr.f32.gmra.mrb[0].mxu0 %v1113
      %v1217 = vpop.f32.mrb[0].mxu0
      %v1218 = vadd.f32 %v1049, %v1217
      %v1219 = vpop.f32.mrb[0].mxu0
      %1220 = vmatprep.mubr.f32.mxu0 0.0
      %1221 = vmatmul.mubr.f32.gmra.mrb[0].mxu0 %v1116
      %v1222 = vpop.f32.mrb[0].mxu0
      %v1223 = vadd.f32 %v1054, %v1222
      %v1224 = vpop.f32.mrb[0].mxu0
      %1225 = vmatprep.mubr.f32.mxu0 0.0
      %1226 = vmatmul.mubr.f32.gmra.mrb[0].mxu0 %v1119
      %v1227 = vpop.f32.mrb[0].mxu0
      %v1228 = vadd.f32 %v1059, %v1227
      %v1229 = vpop.f32.mrb[0].mxu0
      %1230 = vmatprep.mubr.f32.mxu0 0.0
      %1231 = vmatmul.mubr.f32.gmra.mrb[0].mxu0 %v1122
      %v1232 = vpop.f32.mrb[0].mxu0
      %v1233 = vadd.f32 %v1064, %v1232
      %v1234 = vpop.f32.mrb[0].mxu0
      %1235 = vmatprep.mubr.f32.mxu0 0.0
      %1236 = vmatmul.mubr.f32.gmra.mrb[0].mxu0 %v1125
      %v1237 = vpop.f32.mrb[0].mxu0
      %v1238 = vadd.f32 %v1069, %v1237
      %v1239 = vpop.f32.mrb[0].mxu0
      %1240 = vmatprep.mubr.f32.mxu0 0.0
      %1241 = vmatmul.mubr.f32.gmra.mrb[0].mxu0 %v1128
      %v1242 = vpop.f32.mrb[0].mxu0
      %v1243 = vadd.f32 %v1074, %v1242
      %v1244 = vpop.f32.mrb[0].mxu0
      %1245 = vmatprep.mubr.f32.mxu0 0.0
      %1246 = vmatmul.mubr.f32.gmra.mrb[0].mxu0 %v1131
      %v1247 = vpop.f32.mrb[0].mxu0
      %v1248 = vadd.f32 %v1079, %v1247
      %v1249 = vpop.f32.mrb[0].mxu0
      %1250 = vmatprep.mubr.f32.mxu0 0.0
      %1251 = vmatmul.mubr.f32.gmra.mrb[0].mxu0 %v1134
      %v1252 = vpop.f32.mrb[0].mxu0
      %v1253 = vadd.f32 %v1084, %v1252
      %v1254 = vpop.f32.mrb[0].mxu0
      %1255 = vmatprep.mubr.f32.mxu0 0.0
      %1256 = vmatmul.mubr.f32.gmra.mrb[0].mxu0 %v1137
      %v1257 = vpop.f32.mrb[0].mxu0
      %v1258 = vadd.f32 %v1089, %v1257
      %v1259 = vpop.f32.mrb[0].mxu0
      %1260 = vmatprep.mubr.f32.mxu0 0.0
      %1261 = vmatmul.mubr.f32.gmra.mrb[0].mxu0 %v1140
      %v1262 = vpop.f32.mrb[0].mxu0
      %v1263 = vadd.f32 %v1094, %v1262
      %v1264 = vpop.f32.mrb[0].mxu0
      %1265 = vmatprep.mubr.f32.mxu0 0.0
      %1266 = vmatmul.mubr.f32.gmra.mrb[0].mxu0 %v1143
      %v1267 = vpop.f32.mrb[0].mxu0
      %v1268 = vadd.f32 %v1099, %v1267
      %v1269 = vpop.f32.mrb[0].mxu0
      %1270 = vmatprep.mubr.f32.mxu0 0.0
      %1271 = vmatmul.mubr.f32.gmra.mrb[0].mxu0 %v1146
      %v1272 = vpop.f32.mrb[0].mxu0
      %v1273 = vadd.f32 %v1104, %v1272
      %v1274 = vpop.f32.mrb[0].mxu0
      %1275 = vmatprep.mubr.f32.mxu0 0.0
      %1276 = vmatmul.mubr.f32.gmra.mrb[0].mxu0 %v1149
      %v1277 = vpop.f32.mrb[0].mxu0
      %v1278 = vadd.f32 %v1109, %v1277
      %v1279 = vpop.f32.mrb[0].mxu0
      %1280 = vdwg.mxu0
      %v1281 = vld [vmem:[#allocation3 + $0x2] sm:$0xff]
      %v1282 = vld [vmem:[#allocation3 + $0xa] sm:$0xff]
      %v1283 = vld [vmem:[#allocation3 + $0x12] sm:$0xff]
      %v1284 = vld [vmem:[#allocation3 + $0x1a] sm:$0xff]
      %v1285 = vld [vmem:[#allocation3 + $0x22] sm:$0xff]
      %v1286 = vld [vmem:[#allocation3 + $0x2a] sm:$0xff]
      %v1287 = vld [vmem:[#allocation3 + $0x32] sm:$0xff]
      %v1288 = vld [vmem:[#allocation3 + $0x3a] sm:$0xff]
      %v1289 = vld [vmem:[#allocation3 + $0x42] sm:$0xff]
      %v1290 = vld [vmem:[#allocation3 + $0x4a] sm:$0xff]
      %v1291 = vld [vmem:[#allocation3 + $0x52] sm:$0xff]
      %v1292 = vld [vmem:[#allocation3 + $0x5a] sm:$0xff]
      %v1293 = vld [vmem:[#allocation3 + $0x62] sm:$0xf]
      %s1294 = scalar_lea.vmem %s4, 64
      %v1295 = vld [vmem:[%s1294] sm:$0xff]
      %v1296 = vld [vmem:[%s1294 + $0x8] sm:$0xff]
      %v1297 = vld [vmem:[%s1294 + $0x10] sm:$0xff]
      %v1298 = vld [vmem:[%s1294 + $0x18] sm:$0xff]
      %v1300 = vsel %vm295, %v1281, 0
      %v1303 = vsel %vm295, %v1282, 0
      %v1306 = vsel %vm295, %v1283, 0
      %v1309 = vsel %vm295, %v1284, 0
      %v1312 = vsel %vm295, %v1285, 0
      %v1315 = vsel %vm295, %v1286, 0
      %v1318 = vsel %vm295, %v1287, 0
      %v1321 = vsel %vm295, %v1288, 0
      %v1324 = vsel %vm295, %v1289, 0
      %v1327 = vsel %vm295, %v1290, 0
      %v1330 = vsel %vm295, %v1291, 0
      %v1333 = vsel %vm295, %v1292, 0
      %v1336 = vsel %vm295, %v1293, 0
      %1338 = vmatprep.subr.mxu0 0.0
      %1339 = vmatpush1.msra.mxu0 %v1295
      %1340 = vmatprep.subr.mxu0 0.0
      %1341 = vmatpush1.msra.mxu0 %v1296
      %1342 = vmatprep.subr.mxu0 0.0
      %1343 = vmatpush1.msra.mxu0 %v1297
      %1344 = vmatprep.subr.mxu0 0.0
      %1345 = vmatpush1.msra.mxu0 %v1298
      %1346 = vmatprep.subr.mxu0 0.0
      %1347 = vmatpush1.msra.mxu0 0.0
      %1348 = vmatprep.subr.mxu0 0.0
      %1349 = vmatpush1.msra.mxu0 0.0
      %1350 = vmatprep.subr.mxu0 0.0
      %1351 = vmatpush1.msra.mxu0 0.0
      %1352 = vmatprep.subr.mxu0 0.0
      %1353 = vmatpush1.msra.mxu0 0.0
      %1354 = vmatprep.subr.mxu0 0.0
      %1355 = vmatpush1.msra.mxu0 0.0
      %1356 = vmatprep.subr.mxu0 0.0
      %1357 = vmatpush1.msra.mxu0 0.0
      %1358 = vmatprep.subr.mxu0 0.0
      %1359 = vmatpush1.msra.mxu0 0.0
      %1360 = vmatprep.subr.mxu0 0.0
      %1361 = vmatpush1.msra.mxu0 0.0
      %1362 = vmatprep.subr.mxu0 0.0
      %1363 = vmatpush1.msra.mxu0 0.0
      %1364 = vmatprep.subr.mxu0 0.0
      %1365 = vmatpush1.msra.mxu0 0.0
      %1366 = vmatprep.subr.mxu0 0.0
      %1367 = vmatpush1.msra.mxu0 0.0
      %1368 = vmatprep.subr.mxu0 0.0
      %1369 = vmatpush1.msra.mxu0 0.0
      %1370 = vmatprep.subr.mxu0 0.0
      %1371 = vmatpush1.msra.mxu0 0.0
      %1372 = vmatprep.subr.mxu0 0.0
      %1373 = vmatpush1.msra.mxu0 0.0
      %1374 = vmatprep.subr.mxu0 0.0
      %1375 = vmatpush1.msra.mxu0 0.0
      %1376 = vmatprep.subr.mxu0 0.0
      %1377 = vmatpush1.msra.mxu0 0.0
      %1378 = vmatprep.subr.mxu0 0.0
      %1379 = vmatpush1.msra.mxu0 0.0
      %1380 = vmatprep.subr.mxu0 0.0
      %1381 = vmatpush1.msra.mxu0 0.0
      %1382 = vmatprep.subr.mxu0 0.0
      %1383 = vmatpush1.msra.mxu0 0.0
      %1384 = vmatprep.subr.mxu0 0.0
      %1385 = vmatpush1.msra.mxu0 0.0
      %1386 = vmatprep.subr.mxu0 0.0
      %1387 = vmatpush1.msra.mxu0 0.0
      %1388 = vmatprep.subr.mxu0 0.0
      %1389 = vmatpush1.msra.mxu0 0.0
      %1390 = vmatprep.subr.mxu0 0.0
      %1391 = vmatpush1.msra.mxu0 0.0
      %1392 = vmatprep.subr.mxu0 0.0
      %1393 = vmatpush1.msra.mxu0 0.0
      %1394 = vmatprep.subr.mxu0 0.0
      %1395 = vmatpush1.msra.mxu0 0.0
      %1396 = vmatprep.subr.mxu0 0.0
      %1397 = vmatpush1.msra.mxu0 0.0
      %1398 = vmatprep.subr.mxu0 0.0
      %1399 = vmatpush1.msra.mxu0 0.0
      %1400 = vmatprep.subr.mxu0 0.0
      %1401 = vmatpush1.msra.mxu0 0.0
      %1402 = vmatprep.mubr.f32.mxu0 0.0
      %1403 = vmatmul.mubr.f32.gmra.mrb[0].mxu0 %v1300
      %v1404 = vpop.f32.mrb[0].mxu0
      %v1405 = vadd.f32 0.0, %v1404
      %v1406 = vpop.f32.mrb[0].mxu0
      %1407 = vmatprep.mubr.f32.mxu0 0.0
      %1408 = vmatmul.mubr.f32.gmra.mrb[0].mxu0 %v1303
      %v1409 = vpop.f32.mrb[0].mxu0
      %v1410 = vadd.f32 0.0, %v1409
      %v1411 = vpop.f32.mrb[0].mxu0
      %1412 = vmatprep.mubr.f32.mxu0 0.0
      %1413 = vmatmul.mubr.f32.gmra.mrb[0].mxu0 %v1306
      %v1414 = vpop.f32.mrb[0].mxu0
      %v1415 = vadd.f32 0.0, %v1414
      %v1416 = vpop.f32.mrb[0].mxu0
      %1417 = vmatprep.mubr.f32.mxu0 0.0
      %1418 = vmatmul.mubr.f32.gmra.mrb[0].mxu0 %v1309
      %v1419 = vpop.f32.mrb[0].mxu0
      %v1420 = vadd.f32 0.0, %v1419
      %v1421 = vpop.f32.mrb[0].mxu0
      %1422 = vmatprep.mubr.f32.mxu0 0.0
      %1423 = vmatmul.mubr.f32.gmra.mrb[0].mxu0 %v1312
      %v1424 = vpop.f32.mrb[0].mxu0
      %v1425 = vadd.f32 0.0, %v1424
      %v1426 = vpop.f32.mrb[0].mxu0
      %1427 = vmatprep.mubr.f32.mxu0 0.0
      %1428 = vmatmul.mubr.f32.gmra.mrb[0].mxu0 %v1315
      %v1429 = vpop.f32.mrb[0].mxu0
      %v1430 = vadd.f32 0.0, %v1429
      %v1431 = vpop.f32.mrb[0].mxu0
      %1432 = vmatprep.mubr.f32.mxu0 0.0
      %1433 = vmatmul.mubr.f32.gmra.mrb[0].mxu0 %v1318
      %v1434 = vpop.f32.mrb[0].mxu0
      %v1435 = vadd.f32 0.0, %v1434
      %v1436 = vpop.f32.mrb[0].mxu0
      %1437 = vmatprep.mubr.f32.mxu0 0.0
      %1438 = vmatmul.mubr.f32.gmra.mrb[0].mxu0 %v1321
      %v1439 = vpop.f32.mrb[0].mxu0
      %v1440 = vadd.f32 0.0, %v1439
      %v1441 = vpop.f32.mrb[0].mxu0
      %1442 = vmatprep.mubr.f32.mxu0 0.0
      %1443 = vmatmul.mubr.f32.gmra.mrb[0].mxu0 %v1324
      %v1444 = vpop.f32.mrb[0].mxu0
      %v1445 = vadd.f32 0.0, %v1444
      %v1446 = vpop.f32.mrb[0].mxu0
      %1447 = vmatprep.mubr.f32.mxu0 0.0
      %1448 = vmatmul.mubr.f32.gmra.mrb[0].mxu0 %v1327
      %v1449 = vpop.f32.mrb[0].mxu0
      %v1450 = vadd.f32 0.0, %v1449
      %v1451 = vpop.f32.mrb[0].mxu0
      %1452 = vmatprep.mubr.f32.mxu0 0.0
      %1453 = vmatmul.mubr.f32.gmra.mrb[0].mxu0 %v1330
      %v1454 = vpop.f32.mrb[0].mxu0
      %v1455 = vadd.f32 0.0, %v1454
      %v1456 = vpop.f32.mrb[0].mxu0
      %1457 = vmatprep.mubr.f32.mxu0 0.0
      %1458 = vmatmul.mubr.f32.gmra.mrb[0].mxu0 %v1333
      %v1459 = vpop.f32.mrb[0].mxu0
      %v1460 = vadd.f32 0.0, %v1459
      %v1461 = vpop.f32.mrb[0].mxu0
      %1462 = vmatprep.mubr.f32.mxu0 0.0
      %1463 = vmatmul.mubr.f32.gmra.mrb[0].mxu0 %v1336
      %v1464 = vpop.f32.mrb[0].mxu0
      %v1465 = vadd.f32 0.0, %v1464
      %v1466 = vpop.f32.mrb[0].mxu0
      %1467 = vdwg.mxu0
      %v1468 = vadd.f32 %v1218, %v1405
      %v1469 = vadd.f32 %v1223, %v1410
      %v1470 = vadd.f32 %v1228, %v1415
      %v1471 = vadd.f32 %v1233, %v1420
      %v1472 = vadd.f32 %v1238, %v1425
      %v1473 = vadd.f32 %v1243, %v1430
      %v1474 = vadd.f32 %v1248, %v1435
      %v1475 = vadd.f32 %v1253, %v1440
      %v1476 = vadd.f32 %v1258, %v1445
      %v1477 = vadd.f32 %v1263, %v1450
      %v1478 = vadd.f32 %v1268, %v1455
      %v1479 = vadd.f32 %v1273, %v1460
      %v1480 = vadd.f32 %v1278, %v1465
      %v1481 = vld [vmem:[#allocation3 + $0xa] sm:$0xff]
      %v1482 = vld [vmem:[#allocation3 + $0x12] sm:$0xff]
      %v1483 = vld [vmem:[#allocation3 + $0x1a] sm:$0xff]
      %v1484 = vld [vmem:[#allocation3 + $0x22] sm:$0xff]
      %v1485 = vld [vmem:[#allocation3 + $0x2a] sm:$0xff]
      %v1486 = vld [vmem:[#allocation3 + $0x32] sm:$0xff]
      %v1487 = vld [vmem:[#allocation3 + $0x3a] sm:$0xff]
      %v1488 = vld [vmem:[#allocation3 + $0x42] sm:$0xff]
      %v1489 = vld [vmem:[#allocation3 + $0x4a] sm:$0xff]
      %v1490 = vld [vmem:[#allocation3 + $0x52] sm:$0xff]
      %v1491 = vld [vmem:[#allocation3 + $0x5a] sm:$0xff]
      %v1492 = vld [vmem:[#allocation3 + $0x62] sm:$0xff]
      %v1493 = vld [vmem:[#allocation3 + $0x6a] sm:$0xf]
      %s1494 = scalar_lea.vmem %s4, 96
      %v1495 = vld [vmem:[%s1494] sm:$0xff]
      %v1496 = vld [vmem:[%s1494 + $0x8] sm:$0xff]
      %v1497 = vld [vmem:[%s1494 + $0x10] sm:$0xff]
      %v1498 = vld [vmem:[%s1494 + $0x18] sm:$0xff]
      %v1500 = vsel %vm295, %v1481, 0
      %v1503 = vsel %vm295, %v1482, 0
      %v1506 = vsel %vm295, %v1483, 0
      %v1509 = vsel %vm295, %v1484, 0
      %v1512 = vsel %vm295, %v1485, 0
      %v1515 = vsel %vm295, %v1486, 0
      %v1518 = vsel %vm295, %v1487, 0
      %v1521 = vsel %vm295, %v1488, 0
      %v1524 = vsel %vm295, %v1489, 0
      %v1527 = vsel %vm295, %v1490, 0
      %v1530 = vsel %vm295, %v1491, 0
      %v1533 = vsel %vm295, %v1492, 0
      %v1536 = vsel %vm295, %v1493, 0
      %1538 = vmatprep.subr.mxu0 0.0
      %1539 = vmatpush1.msra.mxu0 %v1495
      %1540 = vmatprep.subr.mxu0 0.0
      %1541 = vmatpush1.msra.mxu0 %v1496
      %1542 = vmatprep.subr.mxu0 0.0
      %1543 = vmatpush1.msra.mxu0 %v1497
      %1544 = vmatprep.subr.mxu0 0.0
      %1545 = vmatpush1.msra.mxu0 %v1498
      %1546 = vmatprep.subr.mxu0 0.0
      %1547 = vmatpush1.msra.mxu0 0.0
      %1548 = vmatprep.subr.mxu0 0.0
      %1549 = vmatpush1.msra.mxu0 0.0
      %1550 = vmatprep.subr.mxu0 0.0
      %1551 = vmatpush1.msra.mxu0 0.0
      %1552 = vmatprep.subr.mxu0 0.0
      %1553 = vmatpush1.msra.mxu0 0.0
      %1554 = vmatprep.subr.mxu0 0.0
      %1555 = vmatpush1.msra.mxu0 0.0
      %1556 = vmatprep.subr.mxu0 0.0
      %1557 = vmatpush1.msra.mxu0 0.0
      %1558 = vmatprep.subr.mxu0 0.0
      %1559 = vmatpush1.msra.mxu0 0.0
      %1560 = vmatprep.subr.mxu0 0.0
      %1561 = vmatpush1.msra.mxu0 0.0
      %1562 = vmatprep.subr.mxu0 0.0
      %1563 = vmatpush1.msra.mxu0 0.0
      %1564 = vmatprep.subr.mxu0 0.0
      %1565 = vmatpush1.msra.mxu0 0.0
      %1566 = vmatprep.subr.mxu0 0.0
      %1567 = vmatpush1.msra.mxu0 0.0
      %1568 = vmatprep.subr.mxu0 0.0
      %1569 = vmatpush1.msra.mxu0 0.0
      %1570 = vmatprep.subr.mxu0 0.0
      %1571 = vmatpush1.msra.mxu0 0.0
      %1572 = vmatprep.subr.mxu0 0.0
      %1573 = vmatpush1.msra.mxu0 0.0
      %1574 = vmatprep.subr.mxu0 0.0
      %1575 = vmatpush1.msra.mxu0 0.0
      %1576 = vmatprep.subr.mxu0 0.0
      %1577 = vmatpush1.msra.mxu0 0.0
      %1578 = vmatprep.subr.mxu0 0.0
      %1579 = vmatpush1.msra.mxu0 0.0
      %1580 = vmatprep.subr.mxu0 0.0
      %1581 = vmatpush1.msra.mxu0 0.0
      %1582 = vmatprep.subr.mxu0 0.0
      %1583 = vmatpush1.msra.mxu0 0.0
      %1584 = vmatprep.subr.mxu0 0.0
      %1585 = vmatpush1.msra.mxu0 0.0
      %1586 = vmatprep.subr.mxu0 0.0
      %1587 = vmatpush1.msra.mxu0 0.0
      %1588 = vmatprep.subr.mxu0 0.0
      %1589 = vmatpush1.msra.mxu0 0.0
      %1590 = vmatprep.subr.mxu0 0.0
      %1591 = vmatpush1.msra.mxu0 0.0
      %1592 = vmatprep.subr.mxu0 0.0
      %1593 = vmatpush1.msra.mxu0 0.0
      %1594 = vmatprep.subr.mxu0 0.0
      %1595 = vmatpush1.msra.mxu0 0.0
      %1596 = vmatprep.subr.mxu0 0.0
      %1597 = vmatpush1.msra.mxu0 0.0
      %1598 = vmatprep.subr.mxu0 0.0
      %1599 = vmatpush1.msra.mxu0 0.0
      %1600 = vmatprep.subr.mxu0 0.0
      %1601 = vmatpush1.msra.mxu0 0.0
      %1602 = vmatprep.mubr.f32.mxu0 0.0
      %1603 = vmatmul.mubr.f32.gmra.mrb[0].mxu0 %v1500
      %v1604 = vpop.f32.mrb[0].mxu0
      %v1605 = vadd.f32 0.0, %v1604
      %v1606 = vpop.f32.mrb[0].mxu0
      %1607 = vmatprep.mubr.f32.mxu0 0.0
      %1608 = vmatmul.mubr.f32.gmra.mrb[0].mxu0 %v1503
      %v1609 = vpop.f32.mrb[0].mxu0
      %v1610 = vadd.f32 0.0, %v1609
      %v1611 = vpop.f32.mrb[0].mxu0
      %1612 = vmatprep.mubr.f32.mxu0 0.0
      %1613 = vmatmul.mubr.f32.gmra.mrb[0].mxu0 %v1506
      %v1614 = vpop.f32.mrb[0].mxu0
      %v1615 = vadd.f32 0.0, %v1614
      %v1616 = vpop.f32.mrb[0].mxu0
      %1617 = vmatprep.mubr.f32.mxu0 0.0
      %1618 = vmatmul.mubr.f32.gmra.mrb[0].mxu0 %v1509
      %v1619 = vpop.f32.mrb[0].mxu0
      %v1620 = vadd.f32 0.0, %v1619
      %v1621 = vpop.f32.mrb[0].mxu0
      %1622 = vmatprep.mubr.f32.mxu0 0.0
      %1623 = vmatmul.mubr.f32.gmra.mrb[0].mxu0 %v1512
      %v1624 = vpop.f32.mrb[0].mxu0
      %v1625 = vadd.f32 0.0, %v1624
      %v1626 = vpop.f32.mrb[0].mxu0
      %1627 = vmatprep.mubr.f32.mxu0 0.0
      %1628 = vmatmul.mubr.f32.gmra.mrb[0].mxu0 %v1515
      %v1629 = vpop.f32.mrb[0].mxu0
      %v1630 = vadd.f32 0.0, %v1629
      %v1631 = vpop.f32.mrb[0].mxu0
      %1632 = vmatprep.mubr.f32.mxu0 0.0
      %1633 = vmatmul.mubr.f32.gmra.mrb[0].mxu0 %v1518
      %v1634 = vpop.f32.mrb[0].mxu0
      %v1635 = vadd.f32 0.0, %v1634
      %v1636 = vpop.f32.mrb[0].mxu0
      %1637 = vmatprep.mubr.f32.mxu0 0.0
      %1638 = vmatmul.mubr.f32.gmra.mrb[0].mxu0 %v1521
      %v1639 = vpop.f32.mrb[0].mxu0
      %v1640 = vadd.f32 0.0, %v1639
      %v1641 = vpop.f32.mrb[0].mxu0
      %1642 = vmatprep.mubr.f32.mxu0 0.0
      %1643 = vmatmul.mubr.f32.gmra.mrb[0].mxu0 %v1524
      %v1644 = vpop.f32.mrb[0].mxu0
      %v1645 = vadd.f32 0.0, %v1644
      %v1646 = vpop.f32.mrb[0].mxu0
      %1647 = vmatprep.mubr.f32.mxu0 0.0
      %1648 = vmatmul.mubr.f32.gmra.mrb[0].mxu0 %v1527
      %v1649 = vpop.f32.mrb[0].mxu0
      %v1650 = vadd.f32 0.0, %v1649
      %v1651 = vpop.f32.mrb[0].mxu0
      %1652 = vmatprep.mubr.f32.mxu0 0.0
      %1653 = vmatmul.mubr.f32.gmra.mrb[0].mxu0 %v1530
      %v1654 = vpop.f32.mrb[0].mxu0
      %v1655 = vadd.f32 0.0, %v1654
      %v1656 = vpop.f32.mrb[0].mxu0
      %1657 = vmatprep.mubr.f32.mxu0 0.0
      %1658 = vmatmul.mubr.f32.gmra.mrb[0].mxu0 %v1533
      %v1659 = vpop.f32.mrb[0].mxu0
      %v1660 = vadd.f32 0.0, %v1659
      %v1661 = vpop.f32.mrb[0].mxu0
      %1662 = vmatprep.mubr.f32.mxu0 0.0
      %1663 = vmatmul.mubr.f32.gmra.mrb[0].mxu0 %v1536
      %v1664 = vpop.f32.mrb[0].mxu0
      %v1665 = vadd.f32 0.0, %v1664
      %v1666 = vpop.f32.mrb[0].mxu0
      %1667 = vdwg.mxu0
      %v1668 = vadd.f32 %v1468, %v1605
      %v1669 = vadd.f32 %v1469, %v1610
      %v1670 = vadd.f32 %v1470, %v1615
      %v1671 = vadd.f32 %v1471, %v1620
      %v1672 = vadd.f32 %v1472, %v1625
      %v1673 = vadd.f32 %v1473, %v1630
      %v1674 = vadd.f32 %v1474, %v1635
      %v1675 = vadd.f32 %v1475, %v1640
      %v1676 = vadd.f32 %v1476, %v1645
      %v1677 = vadd.f32 %v1477, %v1650
      %v1678 = vadd.f32 %v1478, %v1655
      %v1679 = vadd.f32 %v1479, %v1660
      %v1680 = vadd.f32 %v1480, %v1665
      %v1681 = vld [vmem:[#allocation3 + $0xb] sm:$0xff]
      %v1682 = vld [vmem:[#allocation3 + $0x13] sm:$0xff]
      %v1683 = vld [vmem:[#allocation3 + $0x1b] sm:$0xff]
      %v1684 = vld [vmem:[#allocation3 + $0x23] sm:$0xff]
      %v1685 = vld [vmem:[#allocation3 + $0x2b] sm:$0xff]
      %v1686 = vld [vmem:[#allocation3 + $0x33] sm:$0xff]
      %v1687 = vld [vmem:[#allocation3 + $0x3b] sm:$0xff]
      %v1688 = vld [vmem:[#allocation3 + $0x43] sm:$0xff]
      %v1689 = vld [vmem:[#allocation3 + $0x4b] sm:$0xff]
      %v1690 = vld [vmem:[#allocation3 + $0x53] sm:$0xff]
      %v1691 = vld [vmem:[#allocation3 + $0x5b] sm:$0xff]
      %v1692 = vld [vmem:[#allocation3 + $0x63] sm:$0xff]
      %v1693 = vld [vmem:[#allocation3 + $0x6b] sm:$0xf]
      %s1694 = scalar_lea.vmem %s4, 128
      %v1695 = vld [vmem:[%s1694] sm:$0xff]
      %v1696 = vld [vmem:[%s1694 + $0x8] sm:$0xff]
      %v1697 = vld [vmem:[%s1694 + $0x10] sm:$0xff]
      %v1698 = vld [vmem:[%s1694 + $0x18] sm:$0xff]
      %v1700 = vsel %vm295, %v1681, 0
      %v1703 = vsel %vm295, %v1682, 0
      %v1706 = vsel %vm295, %v1683, 0
      %v1709 = vsel %vm295, %v1684, 0
      %v1712 = vsel %vm295, %v1685, 0
      %v1715 = vsel %vm295, %v1686, 0
      %v1718 = vsel %vm295, %v1687, 0
      %v1721 = vsel %vm295, %v1688, 0
      %v1724 = vsel %vm295, %v1689, 0
      %v1727 = vsel %vm295, %v1690, 0
      %v1730 = vsel %vm295, %v1691, 0
      %v1733 = vsel %vm295, %v1692, 0
      %v1736 = vsel %vm295, %v1693, 0
      %1738 = vmatprep.subr.mxu0 0.0
      %1739 = vmatpush1.msra.mxu0 %v1695
      %1740 = vmatprep.subr.mxu0 0.0
      %1741 = vmatpush1.msra.mxu0 %v1696
      %1742 = vmatprep.subr.mxu0 0.0
      %1743 = vmatpush1.msra.mxu0 %v1697
      %1744 = vmatprep.subr.mxu0 0.0
      %1745 = vmatpush1.msra.mxu0 %v1698
      %1746 = vmatprep.subr.mxu0 0.0
      %1747 = vmatpush1.msra.mxu0 0.0
      %1748 = vmatprep.subr.mxu0 0.0
      %1749 = vmatpush1.msra.mxu0 0.0
      %1750 = vmatprep.subr.mxu0 0.0
      %1751 = vmatpush1.msra.mxu0 0.0
      %1752 = vmatprep.subr.mxu0 0.0
      %1753 = vmatpush1.msra.mxu0 0.0
      %1754 = vmatprep.subr.mxu0 0.0
      %1755 = vmatpush1.msra.mxu0 0.0
      %1756 = vmatprep.subr.mxu0 0.0
      %1757 = vmatpush1.msra.mxu0 0.0
      %1758 = vmatprep.subr.mxu0 0.0
      %1759 = vmatpush1.msra.mxu0 0.0
      %1760 = vmatprep.subr.mxu0 0.0
      %1761 = vmatpush1.msra.mxu0 0.0
      %1762 = vmatprep.subr.mxu0 0.0
      %1763 = vmatpush1.msra.mxu0 0.0
      %1764 = vmatprep.subr.mxu0 0.0
      %1765 = vmatpush1.msra.mxu0 0.0
      %1766 = vmatprep.subr.mxu0 0.0
      %1767 = vmatpush1.msra.mxu0 0.0
      %1768 = vmatprep.subr.mxu0 0.0
      %1769 = vmatpush1.msra.mxu0 0.0
      %1770 = vmatprep.subr.mxu0 0.0
      %1771 = vmatpush1.msra.mxu0 0.0
      %1772 = vmatprep.subr.mxu0 0.0
      %1773 = vmatpush1.msra.mxu0 0.0
      %1774 = vmatprep.subr.mxu0 0.0
      %1775 = vmatpush1.msra.mxu0 0.0
      %1776 = vmatprep.subr.mxu0 0.0
      %1777 = vmatpush1.msra.mxu0 0.0
      %1778 = vmatprep.subr.mxu0 0.0
      %1779 = vmatpush1.msra.mxu0 0.0
      %1780 = vmatprep.subr.mxu0 0.0
      %1781 = vmatpush1.msra.mxu0 0.0
      %1782 = vmatprep.subr.mxu0 0.0
      %1783 = vmatpush1.msra.mxu0 0.0
      %1784 = vmatprep.subr.mxu0 0.0
      %1785 = vmatpush1.msra.mxu0 0.0
      %1786 = vmatprep.subr.mxu0 0.0
      %1787 = vmatpush1.msra.mxu0 0.0
      %1788 = vmatprep.subr.mxu0 0.0
      %1789 = vmatpush1.msra.mxu0 0.0
      %1790 = vmatprep.subr.mxu0 0.0
      %1791 = vmatpush1.msra.mxu0 0.0
      %1792 = vmatprep.subr.mxu0 0.0
      %1793 = vmatpush1.msra.mxu0 0.0
      %1794 = vmatprep.subr.mxu0 0.0
      %1795 = vmatpush1.msra.mxu0 0.0
      %1796 = vmatprep.subr.mxu0 0.0
      %1797 = vmatpush1.msra.mxu0 0.0
      %1798 = vmatprep.subr.mxu0 0.0
      %1799 = vmatpush1.msra.mxu0 0.0
      %1800 = vmatprep.subr.mxu0 0.0
      %1801 = vmatpush1.msra.mxu0 0.0
      %1802 = vmatprep.mubr.f32.mxu0 0.0
      %1803 = vmatmul.mubr.f32.gmra.mrb[0].mxu0 %v1700
      %v1804 = vpop.f32.mrb[0].mxu0
      %v1805 = vadd.f32 0.0, %v1804
      %v1806 = vpop.f32.mrb[0].mxu0
      %1807 = vmatprep.mubr.f32.mxu0 0.0
      %1808 = vmatmul.mubr.f32.gmra.mrb[0].mxu0 %v1703
      %v1809 = vpop.f32.mrb[0].mxu0
      %v1810 = vadd.f32 0.0, %v1809
      %v1811 = vpop.f32.mrb[0].mxu0
      %1812 = vmatprep.mubr.f32.mxu0 0.0
      %1813 = vmatmul.mubr.f32.gmra.mrb[0].mxu0 %v1706
      %v1814 = vpop.f32.mrb[0].mxu0
      %v1815 = vadd.f32 0.0, %v1814
      %v1816 = vpop.f32.mrb[0].mxu0
      %1817 = vmatprep.mubr.f32.mxu0 0.0
      %1818 = vmatmul.mubr.f32.gmra.mrb[0].mxu0 %v1709
      %v1819 = vpop.f32.mrb[0].mxu0
      %v1820 = vadd.f32 0.0, %v1819
      %v1821 = vpop.f32.mrb[0].mxu0
      %1822 = vmatprep.mubr.f32.mxu0 0.0
      %1823 = vmatmul.mubr.f32.gmra.mrb[0].mxu0 %v1712
      %v1824 = vpop.f32.mrb[0].mxu0
      %v1825 = vadd.f32 0.0, %v1824
      %v1826 = vpop.f32.mrb[0].mxu0
      %1827 = vmatprep.mubr.f32.mxu0 0.0
      %1828 = vmatmul.mubr.f32.gmra.mrb[0].mxu0 %v1715
      %v1829 = vpop.f32.mrb[0].mxu0
      %v1830 = vadd.f32 0.0, %v1829
      %v1831 = vpop.f32.mrb[0].mxu0
      %1832 = vmatprep.mubr.f32.mxu0 0.0
      %1833 = vmatmul.mubr.f32.gmra.mrb[0].mxu0 %v1718
      %v1834 = vpop.f32.mrb[0].mxu0
      %v1835 = vadd.f32 0.0, %v1834
      %v1836 = vpop.f32.mrb[0].mxu0
      %1837 = vmatprep.mubr.f32.mxu0 0.0
      %1838 = vmatmul.mubr.f32.gmra.mrb[0].mxu0 %v1721
      %v1839 = vpop.f32.mrb[0].mxu0
      %v1840 = vadd.f32 0.0, %v1839
      %v1841 = vpop.f32.mrb[0].mxu0
      %1842 = vmatprep.mubr.f32.mxu0 0.0
      %1843 = vmatmul.mubr.f32.gmra.mrb[0].mxu0 %v1724
      %v1844 = vpop.f32.mrb[0].mxu0
      %v1845 = vadd.f32 0.0, %v1844
      %v1846 = vpop.f32.mrb[0].mxu0
      %1847 = vmatprep.mubr.f32.mxu0 0.0
      %1848 = vmatmul.mubr.f32.gmra.mrb[0].mxu0 %v1727
      %v1849 = vpop.f32.mrb[0].mxu0
      %v1850 = vadd.f32 0.0, %v1849
      %v1851 = vpop.f32.mrb[0].mxu0
      %1852 = vmatprep.mubr.f32.mxu0 0.0
      %1853 = vmatmul.mubr.f32.gmra.mrb[0].mxu0 %v1730
      %v1854 = vpop.f32.mrb[0].mxu0
      %v1855 = vadd.f32 0.0, %v1854
      %v1856 = vpop.f32.mrb[0].mxu0
      %1857 = vmatprep.mubr.f32.mxu0 0.0
      %1858 = vmatmul.mubr.f32.gmra.mrb[0].mxu0 %v1733
      %v1859 = vpop.f32.mrb[0].mxu0
      %v1860 = vadd.f32 0.0, %v1859
      %v1861 = vpop.f32.mrb[0].mxu0
      %1862 = vmatprep.mubr.f32.mxu0 0.0
      %1863 = vmatmul.mubr.f32.gmra.mrb[0].mxu0 %v1736
      %v1864 = vpop.f32.mrb[0].mxu0
      %v1865 = vadd.f32 0.0, %v1864
      %v1866 = vpop.f32.mrb[0].mxu0
      %1867 = vdwg.mxu0
      %v1868 = vadd.f32 %v1668, %v1805
      %v1869 = vadd.f32 %v1669, %v1810
      %v1870 = vadd.f32 %v1670, %v1815
      %v1871 = vadd.f32 %v1671, %v1820
      %v1872 = vadd.f32 %v1672, %v1825
      %v1873 = vadd.f32 %v1673, %v1830
      %v1874 = vadd.f32 %v1674, %v1835
      %v1875 = vadd.f32 %v1675, %v1840
      %v1876 = vadd.f32 %v1676, %v1845
      %v1877 = vadd.f32 %v1677, %v1850
      %v1878 = vadd.f32 %v1678, %v1855
      %v1879 = vadd.f32 %v1679, %v1860
      %v1880 = vadd.f32 %v1680, %v1865
      %v1881 = vld [vmem:[#allocation3 + $0xc] sm:$0xff]
      %v1882 = vld [vmem:[#allocation3 + $0x14] sm:$0xff]
      %v1883 = vld [vmem:[#allocation3 + $0x1c] sm:$0xff]
      %v1884 = vld [vmem:[#allocation3 + $0x24] sm:$0xff]
      %v1885 = vld [vmem:[#allocation3 + $0x2c] sm:$0xff]
      %v1886 = vld [vmem:[#allocation3 + $0x34] sm:$0xff]
      %v1887 = vld [vmem:[#allocation3 + $0x3c] sm:$0xff]
      %v1888 = vld [vmem:[#allocation3 + $0x44] sm:$0xff]
      %v1889 = vld [vmem:[#allocation3 + $0x4c] sm:$0xff]
      %v1890 = vld [vmem:[#allocation3 + $0x54] sm:$0xff]
      %v1891 = vld [vmem:[#allocation3 + $0x5c] sm:$0xff]
      %v1892 = vld [vmem:[#allocation3 + $0x64] sm:$0xff]
      %v1893 = vld [vmem:[#allocation3 + $0x6c] sm:$0xf]
      %s1894 = scalar_lea.vmem %s4, 160
      %v1895 = vld [vmem:[%s1894] sm:$0xff]
      %v1896 = vld [vmem:[%s1894 + $0x8] sm:$0xff]
      %v1897 = vld [vmem:[%s1894 + $0x10] sm:$0xff]
      %v1898 = vld [vmem:[%s1894 + $0x18] sm:$0xff]
      %v1900 = vsel %vm295, %v1881, 0
      %v1903 = vsel %vm295, %v1882, 0
      %v1906 = vsel %vm295, %v1883, 0
      %v1909 = vsel %vm295, %v1884, 0
      %v1912 = vsel %vm295, %v1885, 0
      %v1915 = vsel %vm295, %v1886, 0
      %v1918 = vsel %vm295, %v1887, 0
      %v1921 = vsel %vm295, %v1888, 0
      %v1924 = vsel %vm295, %v1889, 0
      %v1927 = vsel %vm295, %v1890, 0
      %v1930 = vsel %vm295, %v1891, 0
      %v1933 = vsel %vm295, %v1892, 0
      %v1936 = vsel %vm295, %v1893, 0
      %1938 = vmatprep.subr.mxu0 0.0
      %1939 = vmatpush1.msra.mxu0 %v1895
      %1940 = vmatprep.subr.mxu0 0.0
      %1941 = vmatpush1.msra.mxu0 %v1896
      %1942 = vmatprep.subr.mxu0 0.0
      %1943 = vmatpush1.msra.mxu0 %v1897
      %1944 = vmatprep.subr.mxu0 0.0
      %1945 = vmatpush1.msra.mxu0 %v1898
      %1946 = vmatprep.subr.mxu0 0.0
      %1947 = vmatpush1.msra.mxu0 0.0
      %1948 = vmatprep.subr.mxu0 0.0
      %1949 = vmatpush1.msra.mxu0 0.0
      %1950 = vmatprep.subr.mxu0 0.0
      %1951 = vmatpush1.msra.mxu0 0.0
      %1952 = vmatprep.subr.mxu0 0.0
      %1953 = vmatpush1.msra.mxu0 0.0
      %1954 = vmatprep.subr.mxu0 0.0
      %1955 = vmatpush1.msra.mxu0 0.0
      %1956 = vmatprep.subr.mxu0 0.0
      %1957 = vmatpush1.msra.mxu0 0.0
      %1958 = vmatprep.subr.mxu0 0.0
      %1959 = vmatpush1.msra.mxu0 0.0
      %1960 = vmatprep.subr.mxu0 0.0
      %1961 = vmatpush1.msra.mxu0 0.0
      %1962 = vmatprep.subr.mxu0 0.0
      %1963 = vmatpush1.msra.mxu0 0.0
      %1964 = vmatprep.subr.mxu0 0.0
      %1965 = vmatpush1.msra.mxu0 0.0
      %1966 = vmatprep.subr.mxu0 0.0
      %1967 = vmatpush1.msra.mxu0 0.0
      %1968 = vmatprep.subr.mxu0 0.0
      %1969 = vmatpush1.msra.mxu0 0.0
      %1970 = vmatprep.subr.mxu0 0.0
      %1971 = vmatpush1.msra.mxu0 0.0
      %1972 = vmatprep.subr.mxu0 0.0
      %1973 = vmatpush1.msra.mxu0 0.0
      %1974 = vmatprep.subr.mxu0 0.0
      %1975 = vmatpush1.msra.mxu0 0.0
      %1976 = vmatprep.subr.mxu0 0.0
      %1977 = vmatpush1.msra.mxu0 0.0
      %1978 = vmatprep.subr.mxu0 0.0
      %1979 = vmatpush1.msra.mxu0 0.0
      %1980 = vmatprep.subr.mxu0 0.0
      %1981 = vmatpush1.msra.mxu0 0.0
      %1982 = vmatprep.subr.mxu0 0.0
      %1983 = vmatpush1.msra.mxu0 0.0
      %1984 = vmatprep.subr.mxu0 0.0
      %1985 = vmatpush1.msra.mxu0 0.0
      %1986 = vmatprep.subr.mxu0 0.0
      %1987 = vmatpush1.msra.mxu0 0.0
      %1988 = vmatprep.subr.mxu0 0.0
      %1989 = vmatpush1.msra.mxu0 0.0
      %1990 = vmatprep.subr.mxu0 0.0
      %1991 = vmatpush1.msra.mxu0 0.0
      %1992 = vmatprep.subr.mxu0 0.0
      %1993 = vmatpush1.msra.mxu0 0.0
      %1994 = vmatprep.subr.mxu0 0.0
      %1995 = vmatpush1.msra.mxu0 0.0
      %1996 = vmatprep.subr.mxu0 0.0
      %1997 = vmatpush1.msra.mxu0 0.0
      %1998 = vmatprep.subr.mxu0 0.0
      %1999 = vmatpush1.msra.mxu0 0.0
      %2000 = vmatprep.subr.mxu0 0.0
      %2001 = vmatpush1.msra.mxu0 0.0
      %2002 = vmatprep.mubr.f32.mxu0 0.0
      %2003 = vmatmul.mubr.f32.gmra.mrb[0].mxu0 %v1900
      %v2004 = vpop.f32.mrb[0].mxu0
      %v2005 = vadd.f32 0.0, %v2004
      %v2006 = vpop.f32.mrb[0].mxu0
      %2007 = vmatprep.mubr.f32.mxu0 0.0
      %2008 = vmatmul.mubr.f32.gmra.mrb[0].mxu0 %v1903
      %v2009 = vpop.f32.mrb[0].mxu0
      %v2010 = vadd.f32 0.0, %v2009
      %v2011 = vpop.f32.mrb[0].mxu0
      %2012 = vmatprep.mubr.f32.mxu0 0.0
      %2013 = vmatmul.mubr.f32.gmra.mrb[0].mxu0 %v1906
      %v2014 = vpop.f32.mrb[0].mxu0
      %v2015 = vadd.f32 0.0, %v2014
      %v2016 = vpop.f32.mrb[0].mxu0
      %2017 = vmatprep.mubr.f32.mxu0 0.0
      %2018 = vmatmul.mubr.f32.gmra.mrb[0].mxu0 %v1909
      %v2019 = vpop.f32.mrb[0].mxu0
      %v2020 = vadd.f32 0.0, %v2019
      %v2021 = vpop.f32.mrb[0].mxu0
      %2022 = vmatprep.mubr.f32.mxu0 0.0
      %2023 = vmatmul.mubr.f32.gmra.mrb[0].mxu0 %v1912
      %v2024 = vpop.f32.mrb[0].mxu0
      %v2025 = vadd.f32 0.0, %v2024
      %v2026 = vpop.f32.mrb[0].mxu0
      %2027 = vmatprep.mubr.f32.mxu0 0.0
      %2028 = vmatmul.mubr.f32.gmra.mrb[0].mxu0 %v1915
      %v2029 = vpop.f32.mrb[0].mxu0
      %v2030 = vadd.f32 0.0, %v2029
      %v2031 = vpop.f32.mrb[0].mxu0
      %2032 = vmatprep.mubr.f32.mxu0 0.0
      %2033 = vmatmul.mubr.f32.gmra.mrb[0].mxu0 %v1918
      %v2034 = vpop.f32.mrb[0].mxu0
      %v2035 = vadd.f32 0.0, %v2034
      %v2036 = vpop.f32.mrb[0].mxu0
      %2037 = vmatprep.mubr.f32.mxu0 0.0
      %2038 = vmatmul.mubr.f32.gmra.mrb[0].mxu0 %v1921
      %v2039 = vpop.f32.mrb[0].mxu0
      %v2040 = vadd.f32 0.0, %v2039
      %v2041 = vpop.f32.mrb[0].mxu0
      %2042 = vmatprep.mubr.f32.mxu0 0.0
      %2043 = vmatmul.mubr.f32.gmra.mrb[0].mxu0 %v1924
      %v2044 = vpop.f32.mrb[0].mxu0
      %v2045 = vadd.f32 0.0, %v2044
      %v2046 = vpop.f32.mrb[0].mxu0
      %2047 = vmatprep.mubr.f32.mxu0 0.0
      %2048 = vmatmul.mubr.f32.gmra.mrb[0].mxu0 %v1927
      %v2049 = vpop.f32.mrb[0].mxu0
      %v2050 = vadd.f32 0.0, %v2049
      %v2051 = vpop.f32.mrb[0].mxu0
      %2052 = vmatprep.mubr.f32.mxu0 0.0
      %2053 = vmatmul.mubr.f32.gmra.mrb[0].mxu0 %v1930
      %v2054 = vpop.f32.mrb[0].mxu0
      %v2055 = vadd.f32 0.0, %v2054
      %v2056 = vpop.f32.mrb[0].mxu0
      %2057 = vmatprep.mubr.f32.mxu0 0.0
      %2058 = vmatmul.mubr.f32.gmra.mrb[0].mxu0 %v1933
      %v2059 = vpop.f32.mrb[0].mxu0
      %v2060 = vadd.f32 0.0, %v2059
      %v2061 = vpop.f32.mrb[0].mxu0
      %2062 = vmatprep.mubr.f32.mxu0 0.0
      %2063 = vmatmul.mubr.f32.gmra.mrb[0].mxu0 %v1936
      %v2064 = vpop.f32.mrb[0].mxu0
      %v2065 = vadd.f32 0.0, %v2064
      %v2066 = vpop.f32.mrb[0].mxu0
      %2067 = vdwg.mxu0
      %v2068 = vadd.f32 %v1868, %v2005
      %v2069 = vadd.f32 %v1869, %v2010
      %v2070 = vadd.f32 %v1870, %v2015
      %v2071 = vadd.f32 %v1871, %v2020
      %v2072 = vadd.f32 %v1872, %v2025
      %v2073 = vadd.f32 %v1873, %v2030
      %v2074 = vadd.f32 %v1874, %v2035
      %v2075 = vadd.f32 %v1875, %v2040
      %v2076 = vadd.f32 %v1876, %v2045
      %v2077 = vadd.f32 %v1877, %v2050
      %v2078 = vadd.f32 %v1878, %v2055
      %v2079 = vadd.f32 %v1879, %v2060
      %v2080 = vadd.f32 %v1880, %v2065
      %v2081 = vld [vmem:[#allocation3 + $0x14] sm:$0xff]
      %v2082 = vld [vmem:[#allocation3 + $0x1c] sm:$0xff]
      %v2083 = vld [vmem:[#allocation3 + $0x24] sm:$0xff]
      %v2084 = vld [vmem:[#allocation3 + $0x2c] sm:$0xff]
      %v2085 = vld [vmem:[#allocation3 + $0x34] sm:$0xff]
      %v2086 = vld [vmem:[#allocation3 + $0x3c] sm:$0xff]
      %v2087 = vld [vmem:[#allocation3 + $0x44] sm:$0xff]
      %v2088 = vld [vmem:[#allocation3 + $0x4c] sm:$0xff]
      %v2089 = vld [vmem:[#allocation3 + $0x54] sm:$0xff]
      %v2090 = vld [vmem:[#allocation3 + $0x5c] sm:$0xff]
      %v2091 = vld [vmem:[#allocation3 + $0x64] sm:$0xff]
      %v2092 = vld [vmem:[#allocation3 + $0x6c] sm:$0xff]
      %v2093 = vld [vmem:[#allocation3 + $0x74] sm:$0xf]
      %s2094 = scalar_lea.vmem %s4, 192
      %v2095 = vld [vmem:[%s2094] sm:$0xff]
      %v2096 = vld [vmem:[%s2094 + $0x8] sm:$0xff]
      %v2097 = vld [vmem:[%s2094 + $0x10] sm:$0xff]
      %v2098 = vld [vmem:[%s2094 + $0x18] sm:$0xff]
      %v2100 = vsel %vm295, %v2081, 0
      %v2103 = vsel %vm295, %v2082, 0
      %v2106 = vsel %vm295, %v2083, 0
      %v2109 = vsel %vm295, %v2084, 0
      %v2112 = vsel %vm295, %v2085, 0
      %v2115 = vsel %vm295, %v2086, 0
      %v2118 = vsel %vm295, %v2087, 0
      %v2121 = vsel %vm295, %v2088, 0
      %v2124 = vsel %vm295, %v2089, 0
      %v2127 = vsel %vm295, %v2090, 0
      %v2130 = vsel %vm295, %v2091, 0
      %v2133 = vsel %vm295, %v2092, 0
      %v2136 = vsel %vm295, %v2093, 0
      %2138 = vmatprep.subr.mxu0 0.0
      %2139 = vmatpush1.msra.mxu0 %v2095
      %2140 = vmatprep.subr.mxu0 0.0
      %2141 = vmatpush1.msra.mxu0 %v2096
      %2142 = vmatprep.subr.mxu0 0.0
      %2143 = vmatpush1.msra.mxu0 %v2097
      %2144 = vmatprep.subr.mxu0 0.0
      %2145 = vmatpush1.msra.mxu0 %v2098
      %2146 = vmatprep.subr.mxu0 0.0
      %2147 = vmatpush1.msra.mxu0 0.0
      %2148 = vmatprep.subr.mxu0 0.0
      %2149 = vmatpush1.msra.mxu0 0.0
      %2150 = vmatprep.subr.mxu0 0.0
      %2151 = vmatpush1.msra.mxu0 0.0
      %2152 = vmatprep.subr.mxu0 0.0
      %2153 = vmatpush1.msra.mxu0 0.0
      %2154 = vmatprep.subr.mxu0 0.0
      %2155 = vmatpush1.msra.mxu0 0.0
      %2156 = vmatprep.subr.mxu0 0.0
      %2157 = vmatpush1.msra.mxu0 0.0
      %2158 = vmatprep.subr.mxu0 0.0
      %2159 = vmatpush1.msra.mxu0 0.0
      %2160 = vmatprep.subr.mxu0 0.0
      %2161 = vmatpush1.msra.mxu0 0.0
      %2162 = vmatprep.subr.mxu0 0.0
      %2163 = vmatpush1.msra.mxu0 0.0
      %2164 = vmatprep.subr.mxu0 0.0
      %2165 = vmatpush1.msra.mxu0 0.0
      %2166 = vmatprep.subr.mxu0 0.0
      %2167 = vmatpush1.msra.mxu0 0.0
      %2168 = vmatprep.subr.mxu0 0.0
      %2169 = vmatpush1.msra.mxu0 0.0
      %2170 = vmatprep.subr.mxu0 0.0
      %2171 = vmatpush1.msra.mxu0 0.0
      %2172 = vmatprep.subr.mxu0 0.0
      %2173 = vmatpush1.msra.mxu0 0.0
      %2174 = vmatprep.subr.mxu0 0.0
      %2175 = vmatpush1.msra.mxu0 0.0
      %2176 = vmatprep.subr.mxu0 0.0
      %2177 = vmatpush1.msra.mxu0 0.0
      %2178 = vmatprep.subr.mxu0 0.0
      %2179 = vmatpush1.msra.mxu0 0.0
      %2180 = vmatprep.subr.mxu0 0.0
      %2181 = vmatpush1.msra.mxu0 0.0
      %2182 = vmatprep.subr.mxu0 0.0
      %2183 = vmatpush1.msra.mxu0 0.0
      %2184 = vmatprep.subr.mxu0 0.0
      %2185 = vmatpush1.msra.mxu0 0.0
      %2186 = vmatprep.subr.mxu0 0.0
      %2187 = vmatpush1.msra.mxu0 0.0
      %2188 = vmatprep.subr.mxu0 0.0
      %2189 = vmatpush1.msra.mxu0 0.0
      %2190 = vmatprep.subr.mxu0 0.0
      %2191 = vmatpush1.msra.mxu0 0.0
      %2192 = vmatprep.subr.mxu0 0.0
      %2193 = vmatpush1.msra.mxu0 0.0
      %2194 = vmatprep.subr.mxu0 0.0
      %2195 = vmatpush1.msra.mxu0 0.0
      %2196 = vmatprep.subr.mxu0 0.0
      %2197 = vmatpush1.msra.mxu0 0.0
      %2198 = vmatprep.subr.mxu0 0.0
      %2199 = vmatpush1.msra.mxu0 0.0
      %2200 = vmatprep.subr.mxu0 0.0
      %2201 = vmatpush1.msra.mxu0 0.0
      %2202 = vmatprep.mubr.f32.mxu0 0.0
      %2203 = vmatmul.mubr.f32.gmra.mrb[0].mxu0 %v2100
      %v2204 = vpop.f32.mrb[0].mxu0
      %v2205 = vadd.f32 0.0, %v2204
      %v2206 = vpop.f32.mrb[0].mxu0
      %2207 = vmatprep.mubr.f32.mxu0 0.0
      %2208 = vmatmul.mubr.f32.gmra.mrb[0].mxu0 %v2103
      %v2209 = vpop.f32.mrb[0].mxu0
      %v2210 = vadd.f32 0.0, %v2209
      %v2211 = vpop.f32.mrb[0].mxu0
      %2212 = vmatprep.mubr.f32.mxu0 0.0
      %2213 = vmatmul.mubr.f32.gmra.mrb[0].mxu0 %v2106
      %v2214 = vpop.f32.mrb[0].mxu0
      %v2215 = vadd.f32 0.0, %v2214
      %v2216 = vpop.f32.mrb[0].mxu0
      %2217 = vmatprep.mubr.f32.mxu0 0.0
      %2218 = vmatmul.mubr.f32.gmra.mrb[0].mxu0 %v2109
      %v2219 = vpop.f32.mrb[0].mxu0
      %v2220 = vadd.f32 0.0, %v2219
      %v2221 = vpop.f32.mrb[0].mxu0
      %2222 = vmatprep.mubr.f32.mxu0 0.0
      %2223 = vmatmul.mubr.f32.gmra.mrb[0].mxu0 %v2112
      %v2224 = vpop.f32.mrb[0].mxu0
      %v2225 = vadd.f32 0.0, %v2224
      %v2226 = vpop.f32.mrb[0].mxu0
      %2227 = vmatprep.mubr.f32.mxu0 0.0
      %2228 = vmatmul.mubr.f32.gmra.mrb[0].mxu0 %v2115
      %v2229 = vpop.f32.mrb[0].mxu0
      %v2230 = vadd.f32 0.0, %v2229
      %v2231 = vpop.f32.mrb[0].mxu0
      %2232 = vmatprep.mubr.f32.mxu0 0.0
      %2233 = vmatmul.mubr.f32.gmra.mrb[0].mxu0 %v2118
      %v2234 = vpop.f32.mrb[0].mxu0
      %v2235 = vadd.f32 0.0, %v2234
      %v2236 = vpop.f32.mrb[0].mxu0
      %2237 = vmatprep.mubr.f32.mxu0 0.0
      %2238 = vmatmul.mubr.f32.gmra.mrb[0].mxu0 %v2121
      %v2239 = vpop.f32.mrb[0].mxu0
      %v2240 = vadd.f32 0.0, %v2239
      %v2241 = vpop.f32.mrb[0].mxu0
      %2242 = vmatprep.mubr.f32.mxu0 0.0
      %2243 = vmatmul.mubr.f32.gmra.mrb[0].mxu0 %v2124
      %v2244 = vpop.f32.mrb[0].mxu0
      %v2245 = vadd.f32 0.0, %v2244
      %v2246 = vpop.f32.mrb[0].mxu0
      %2247 = vmatprep.mubr.f32.mxu0 0.0
      %2248 = vmatmul.mubr.f32.gmra.mrb[0].mxu0 %v2127
      %v2249 = vpop.f32.mrb[0].mxu0
      %v2250 = vadd.f32 0.0, %v2249
      %v2251 = vpop.f32.mrb[0].mxu0
      %2252 = vmatprep.mubr.f32.mxu0 0.0
      %2253 = vmatmul.mubr.f32.gmra.mrb[0].mxu0 %v2130
      %v2254 = vpop.f32.mrb[0].mxu0
      %v2255 = vadd.f32 0.0, %v2254
      %v2256 = vpop.f32.mrb[0].mxu0
      %2257 = vmatprep.mubr.f32.mxu0 0.0
      %2258 = vmatmul.mubr.f32.gmra.mrb[0].mxu0 %v2133
      %v2259 = vpop.f32.mrb[0].mxu0
      %v2260 = vadd.f32 0.0, %v2259
      %v2261 = vpop.f32.mrb[0].mxu0
      %2262 = vmatprep.mubr.f32.mxu0 0.0
      %2263 = vmatmul.mubr.f32.gmra.mrb[0].mxu0 %v2136
      %v2264 = vpop.f32.mrb[0].mxu0
      %v2265 = vadd.f32 0.0, %v2264
      %v2266 = vpop.f32.mrb[0].mxu0
      %2267 = vdwg.mxu0
      %v2268 = vadd.f32 %v2068, %v2205
      %v2269 = vadd.f32 %v2069, %v2210
      %v2270 = vadd.f32 %v2070, %v2215
      %v2271 = vadd.f32 %v2071, %v2220
      %v2272 = vadd.f32 %v2072, %v2225
      %v2273 = vadd.f32 %v2073, %v2230
      %v2274 = vadd.f32 %v2074, %v2235
      %v2275 = vadd.f32 %v2075, %v2240
      %v2276 = vadd.f32 %v2076, %v2245
      %v2277 = vadd.f32 %v2077, %v2250
      %v2278 = vadd.f32 %v2078, %v2255
      %v2279 = vadd.f32 %v2079, %v2260
      %v2280 = vadd.f32 %v2080, %v2265
      %v2281 = vld [vmem:[#allocation3 + $0x15] sm:$0xff]
      %v2282 = vld [vmem:[#allocation3 + $0x1d] sm:$0xff]
      %v2283 = vld [vmem:[#allocation3 + $0x25] sm:$0xff]
      %v2284 = vld [vmem:[#allocation3 + $0x2d] sm:$0xff]
      %v2285 = vld [vmem:[#allocation3 + $0x35] sm:$0xff]
      %v2286 = vld [vmem:[#allocation3 + $0x3d] sm:$0xff]
      %v2287 = vld [vmem:[#allocation3 + $0x45] sm:$0xff]
      %v2288 = vld [vmem:[#allocation3 + $0x4d] sm:$0xff]
      %v2289 = vld [vmem:[#allocation3 + $0x55] sm:$0xff]
      %v2290 = vld [vmem:[#allocation3 + $0x5d] sm:$0xff]
      %v2291 = vld [vmem:[#allocation3 + $0x65] sm:$0xff]
      %v2292 = vld [vmem:[#allocation3 + $0x6d] sm:$0xff]
      %v2293 = vld [vmem:[#allocation3 + $0x75] sm:$0xf]
      %s2294 = scalar_lea.vmem %s4, 224
      %v2295 = vld [vmem:[%s2294] sm:$0xff]
      %v2296 = vld [vmem:[%s2294 + $0x8] sm:$0xff]
      %v2297 = vld [vmem:[%s2294 + $0x10] sm:$0xff]
      %v2298 = vld [vmem:[%s2294 + $0x18] sm:$0xff]
      %v2300 = vsel %vm295, %v2281, 0
      %v2303 = vsel %vm295, %v2282, 0
      %v2306 = vsel %vm295, %v2283, 0
      %v2309 = vsel %vm295, %v2284, 0
      %v2312 = vsel %vm295, %v2285, 0
      %v2315 = vsel %vm295, %v2286, 0
      %v2318 = vsel %vm295, %v2287, 0
      %v2321 = vsel %vm295, %v2288, 0
      %v2324 = vsel %vm295, %v2289, 0
      %v2327 = vsel %vm295, %v2290, 0
      %v2330 = vsel %vm295, %v2291, 0
      %v2333 = vsel %vm295, %v2292, 0
      %v2336 = vsel %vm295, %v2293, 0
      %2338 = vmatprep.subr.mxu0 0.0
      %2339 = vmatpush1.msra.mxu0 %v2295
      %2340 = vmatprep.subr.mxu0 0.0
      %2341 = vmatpush1.msra.mxu0 %v2296
      %2342 = vmatprep.subr.mxu0 0.0
      %2343 = vmatpush1.msra.mxu0 %v2297
      %2344 = vmatprep.subr.mxu0 0.0
      %2345 = vmatpush1.msra.mxu0 %v2298
      %2346 = vmatprep.subr.mxu0 0.0
      %2347 = vmatpush1.msra.mxu0 0.0
      %2348 = vmatprep.subr.mxu0 0.0
      %2349 = vmatpush1.msra.mxu0 0.0
      %2350 = vmatprep.subr.mxu0 0.0
      %2351 = vmatpush1.msra.mxu0 0.0
      %2352 = vmatprep.subr.mxu0 0.0
      %2353 = vmatpush1.msra.mxu0 0.0
      %2354 = vmatprep.subr.mxu0 0.0
      %2355 = vmatpush1.msra.mxu0 0.0
      %2356 = vmatprep.subr.mxu0 0.0
      %2357 = vmatpush1.msra.mxu0 0.0
      %2358 = vmatprep.subr.mxu0 0.0
      %2359 = vmatpush1.msra.mxu0 0.0
      %2360 = vmatprep.subr.mxu0 0.0
      %2361 = vmatpush1.msra.mxu0 0.0
      %2362 = vmatprep.subr.mxu0 0.0
      %2363 = vmatpush1.msra.mxu0 0.0
      %2364 = vmatprep.subr.mxu0 0.0
      %2365 = vmatpush1.msra.mxu0 0.0
      %2366 = vmatprep.subr.mxu0 0.0
      %2367 = vmatpush1.msra.mxu0 0.0
      %2368 = vmatprep.subr.mxu0 0.0
      %2369 = vmatpush1.msra.mxu0 0.0
      %2370 = vmatprep.subr.mxu0 0.0
      %2371 = vmatpush1.msra.mxu0 0.0
      %2372 = vmatprep.subr.mxu0 0.0
      %2373 = vmatpush1.msra.mxu0 0.0
      %2374 = vmatprep.subr.mxu0 0.0
      %2375 = vmatpush1.msra.mxu0 0.0
      %2376 = vmatprep.subr.mxu0 0.0
      %2377 = vmatpush1.msra.mxu0 0.0
      %2378 = vmatprep.subr.mxu0 0.0
      %2379 = vmatpush1.msra.mxu0 0.0
      %2380 = vmatprep.subr.mxu0 0.0
      %2381 = vmatpush1.msra.mxu0 0.0
      %2382 = vmatprep.subr.mxu0 0.0
      %2383 = vmatpush1.msra.mxu0 0.0
      %2384 = vmatprep.subr.mxu0 0.0
      %2385 = vmatpush1.msra.mxu0 0.0
      %2386 = vmatprep.subr.mxu0 0.0
      %2387 = vmatpush1.msra.mxu0 0.0
      %2388 = vmatprep.subr.mxu0 0.0
      %2389 = vmatpush1.msra.mxu0 0.0
      %2390 = vmatprep.subr.mxu0 0.0
      %2391 = vmatpush1.msra.mxu0 0.0
      %2392 = vmatprep.subr.mxu0 0.0
      %2393 = vmatpush1.msra.mxu0 0.0
      %2394 = vmatprep.subr.mxu0 0.0
      %2395 = vmatpush1.msra.mxu0 0.0
      %2396 = vmatprep.subr.mxu0 0.0
      %2397 = vmatpush1.msra.mxu0 0.0
      %2398 = vmatprep.subr.mxu0 0.0
      %2399 = vmatpush1.msra.mxu0 0.0
      %2400 = vmatprep.subr.mxu0 0.0
      %2401 = vmatpush1.msra.mxu0 0.0
      %2402 = vmatprep.mubr.f32.mxu0 0.0
      %2403 = vmatmul.mubr.f32.gmra.mrb[0].mxu0 %v2300
      %v2404 = vpop.f32.mrb[0].mxu0
      %v2405 = vadd.f32 0.0, %v2404
      %v2406 = vpop.f32.mrb[0].mxu0
      %2407 = vmatprep.mubr.f32.mxu0 0.0
      %2408 = vmatmul.mubr.f32.gmra.mrb[0].mxu0 %v2303
      %v2409 = vpop.f32.mrb[0].mxu0
      %v2410 = vadd.f32 0.0, %v2409
      %v2411 = vpop.f32.mrb[0].mxu0
      %2412 = vmatprep.mubr.f32.mxu0 0.0
      %2413 = vmatmul.mubr.f32.gmra.mrb[0].mxu0 %v2306
      %v2414 = vpop.f32.mrb[0].mxu0
      %v2415 = vadd.f32 0.0, %v2414
      %v2416 = vpop.f32.mrb[0].mxu0
      %2417 = vmatprep.mubr.f32.mxu0 0.0
      %2418 = vmatmul.mubr.f32.gmra.mrb[0].mxu0 %v2309
      %v2419 = vpop.f32.mrb[0].mxu0
      %v2420 = vadd.f32 0.0, %v2419
      %v2421 = vpop.f32.mrb[0].mxu0
      %2422 = vmatprep.mubr.f32.mxu0 0.0
      %2423 = vmatmul.mubr.f32.gmra.mrb[0].mxu0 %v2312
      %v2424 = vpop.f32.mrb[0].mxu0
      %v2425 = vadd.f32 0.0, %v2424
      %v2426 = vpop.f32.mrb[0].mxu0
      %2427 = vmatprep.mubr.f32.mxu0 0.0
      %2428 = vmatmul.mubr.f32.gmra.mrb[0].mxu0 %v2315
      %v2429 = vpop.f32.mrb[0].mxu0
      %v2430 = vadd.f32 0.0, %v2429
      %v2431 = vpop.f32.mrb[0].mxu0
      %2432 = vmatprep.mubr.f32.mxu0 0.0
      %2433 = vmatmul.mubr.f32.gmra.mrb[0].mxu0 %v2318
      %v2434 = vpop.f32.mrb[0].mxu0
      %v2435 = vadd.f32 0.0, %v2434
      %v2436 = vpop.f32.mrb[0].mxu0
      %2437 = vmatprep.mubr.f32.mxu0 0.0
      %2438 = vmatmul.mubr.f32.gmra.mrb[0].mxu0 %v2321
      %v2439 = vpop.f32.mrb[0].mxu0
      %v2440 = vadd.f32 0.0, %v2439
      %v2441 = vpop.f32.mrb[0].mxu0
      %2442 = vmatprep.mubr.f32.mxu0 0.0
      %2443 = vmatmul.mubr.f32.gmra.mrb[0].mxu0 %v2324
      %v2444 = vpop.f32.mrb[0].mxu0
      %v2445 = vadd.f32 0.0, %v2444
      %v2446 = vpop.f32.mrb[0].mxu0
      %2447 = vmatprep.mubr.f32.mxu0 0.0
      %2448 = vmatmul.mubr.f32.gmra.mrb[0].mxu0 %v2327
      %v2449 = vpop.f32.mrb[0].mxu0
      %v2450 = vadd.f32 0.0, %v2449
      %v2451 = vpop.f32.mrb[0].mxu0
      %2452 = vmatprep.mubr.f32.mxu0 0.0
      %2453 = vmatmul.mubr.f32.gmra.mrb[0].mxu0 %v2330
      %v2454 = vpop.f32.mrb[0].mxu0
      %v2455 = vadd.f32 0.0, %v2454
      %v2456 = vpop.f32.mrb[0].mxu0
      %2457 = vmatprep.mubr.f32.mxu0 0.0
      %2458 = vmatmul.mubr.f32.gmra.mrb[0].mxu0 %v2333
      %v2459 = vpop.f32.mrb[0].mxu0
      %v2460 = vadd.f32 0.0, %v2459
      %v2461 = vpop.f32.mrb[0].mxu0
      %2462 = vmatprep.mubr.f32.mxu0 0.0
      %2463 = vmatmul.mubr.f32.gmra.mrb[0].mxu0 %v2336
      %v2464 = vpop.f32.mrb[0].mxu0
      %v2465 = vadd.f32 0.0, %v2464
      %v2466 = vpop.f32.mrb[0].mxu0
      %2467 = vdwg.mxu0
      %v2468 = vadd.f32 %v2268, %v2405
      %v2469 = vadd.f32 %v2269, %v2410
      %v2470 = vadd.f32 %v2270, %v2415
      %v2471 = vadd.f32 %v2271, %v2420
      %v2472 = vadd.f32 %v2272, %v2425
      %v2473 = vadd.f32 %v2273, %v2430
      %v2474 = vadd.f32 %v2274, %v2435
      %v2475 = vadd.f32 %v2275, %v2440
      %v2476 = vadd.f32 %v2276, %v2445
      %v2477 = vadd.f32 %v2277, %v2450
      %v2478 = vadd.f32 %v2278, %v2455
      %v2479 = vadd.f32 %v2279, %v2460
      %v2480 = vadd.f32 %v2280, %v2465
      %v2481 = vld [vmem:[#allocation3 + $0x16] sm:$0xff]
      %v2482 = vld [vmem:[#allocation3 + $0x1e] sm:$0xff]
      %v2483 = vld [vmem:[#allocation3 + $0x26] sm:$0xff]
      %v2484 = vld [vmem:[#allocation3 + $0x2e] sm:$0xff]
      %v2485 = vld [vmem:[#allocation3 + $0x36] sm:$0xff]
      %v2486 = vld [vmem:[#allocation3 + $0x3e] sm:$0xff]
      %v2487 = vld [vmem:[#allocation3 + $0x46] sm:$0xff]
      %v2488 = vld [vmem:[#allocation3 + $0x4e] sm:$0xff]
      %v2489 = vld [vmem:[#allocation3 + $0x56] sm:$0xff]
      %v2490 = vld [vmem:[#allocation3 + $0x5e] sm:$0xff]
      %v2491 = vld [vmem:[#allocation3 + $0x66] sm:$0xff]
      %v2492 = vld [vmem:[#allocation3 + $0x6e] sm:$0xff]
      %v2493 = vld [vmem:[#allocation3 + $0x76] sm:$0xf]
      %s2494 = scalar_lea.vmem %s4, 256
      %v2495 = vld [vmem:[%s2494] sm:$0xff]
      %v2496 = vld [vmem:[%s2494 + $0x8] sm:$0xff]
      %v2497 = vld [vmem:[%s2494 + $0x10] sm:$0xff]
      %v2498 = vld [vmem:[%s2494 + $0x18] sm:$0xff]
      %v2500 = vsel %vm295, %v2481, 0
      %v2503 = vsel %vm295, %v2482, 0
      %v2506 = vsel %vm295, %v2483, 0
      %v2509 = vsel %vm295, %v2484, 0
      %v2512 = vsel %vm295, %v2485, 0
      %v2515 = vsel %vm295, %v2486, 0
      %v2518 = vsel %vm295, %v2487, 0
      %v2521 = vsel %vm295, %v2488, 0
      %v2524 = vsel %vm295, %v2489, 0
      %v2527 = vsel %vm295, %v2490, 0
      %v2530 = vsel %vm295, %v2491, 0
      %v2533 = vsel %vm295, %v2492, 0
      %v2536 = vsel %vm295, %v2493, 0
      %2538 = vmatprep.subr.mxu0 0.0
      %2539 = vmatpush1.msra.mxu0 %v2495
      %2540 = vmatprep.subr.mxu0 0.0
      %2541 = vmatpush1.msra.mxu0 %v2496
      %2542 = vmatprep.subr.mxu0 0.0
      %2543 = vmatpush1.msra.mxu0 %v2497
      %2544 = vmatprep.subr.mxu0 0.0
      %2545 = vmatpush1.msra.mxu0 %v2498
      %2546 = vmatprep.subr.mxu0 0.0
      %2547 = vmatpush1.msra.mxu0 0.0
      %2548 = vmatprep.subr.mxu0 0.0
      %2549 = vmatpush1.msra.mxu0 0.0
      %2550 = vmatprep.subr.mxu0 0.0
      %2551 = vmatpush1.msra.mxu0 0.0
      %2552 = vmatprep.subr.mxu0 0.0
      %2553 = vmatpush1.msra.mxu0 0.0
      %2554 = vmatprep.subr.mxu0 0.0
      %2555 = vmatpush1.msra.mxu0 0.0
      %2556 = vmatprep.subr.mxu0 0.0
      %2557 = vmatpush1.msra.mxu0 0.0
      %2558 = vmatprep.subr.mxu0 0.0
      %2559 = vmatpush1.msra.mxu0 0.0
      %2560 = vmatprep.subr.mxu0 0.0
      %2561 = vmatpush1.msra.mxu0 0.0
      %2562 = vmatprep.subr.mxu0 0.0
      %2563 = vmatpush1.msra.mxu0 0.0
      %2564 = vmatprep.subr.mxu0 0.0
      %2565 = vmatpush1.msra.mxu0 0.0
      %2566 = vmatprep.subr.mxu0 0.0
      %2567 = vmatpush1.msra.mxu0 0.0
      %2568 = vmatprep.subr.mxu0 0.0
      %2569 = vmatpush1.msra.mxu0 0.0
      %2570 = vmatprep.subr.mxu0 0.0
      %2571 = vmatpush1.msra.mxu0 0.0
      %2572 = vmatprep.subr.mxu0 0.0
      %2573 = vmatpush1.msra.mxu0 0.0
      %2574 = vmatprep.subr.mxu0 0.0
      %2575 = vmatpush1.msra.mxu0 0.0
      %2576 = vmatprep.subr.mxu0 0.0
      %2577 = vmatpush1.msra.mxu0 0.0
      %2578 = vmatprep.subr.mxu0 0.0
      %2579 = vmatpush1.msra.mxu0 0.0
      %2580 = vmatprep.subr.mxu0 0.0
      %2581 = vmatpush1.msra.mxu0 0.0
      %2582 = vmatprep.subr.mxu0 0.0
      %2583 = vmatpush1.msra.mxu0 0.0
      %2584 = vmatprep.subr.mxu0 0.0
      %2585 = vmatpush1.msra.mxu0 0.0
      %2586 = vmatprep.subr.mxu0 0.0
      %2587 = vmatpush1.msra.mxu0 0.0
      %2588 = vmatprep.subr.mxu0 0.0
      %2589 = vmatpush1.msra.mxu0 0.0
      %2590 = vmatprep.subr.mxu0 0.0
      %2591 = vmatpush1.msra.mxu0 0.0
      %2592 = vmatprep.subr.mxu0 0.0
      %2593 = vmatpush1.msra.mxu0 0.0
      %2594 = vmatprep.subr.mxu0 0.0
      %2595 = vmatpush1.msra.mxu0 0.0
      %2596 = vmatprep.subr.mxu0 0.0
      %2597 = vmatpush1.msra.mxu0 0.0
      %2598 = vmatprep.subr.mxu0 0.0
      %2599 = vmatpush1.msra.mxu0 0.0
      %2600 = vmatprep.subr.mxu0 0.0
      %2601 = vmatpush1.msra.mxu0 0.0
      %2602 = vmatprep.mubr.f32.mxu0 0.0
      %2603 = vmatmul.mubr.f32.gmra.mrb[0].mxu0 %v2500
      %v2604 = vpop.f32.mrb[0].mxu0
      %v2605 = vadd.f32 0.0, %v2604
      %v2606 = vpop.f32.mrb[0].mxu0
      %2607 = vmatprep.mubr.f32.mxu0 0.0
      %2608 = vmatmul.mubr.f32.gmra.mrb[0].mxu0 %v2503
      %v2609 = vpop.f32.mrb[0].mxu0
      %v2610 = vadd.f32 0.0, %v2609
      %v2611 = vpop.f32.mrb[0].mxu0
      %2612 = vmatprep.mubr.f32.mxu0 0.0
      %2613 = vmatmul.mubr.f32.gmra.mrb[0].mxu0 %v2506
      %v2614 = vpop.f32.mrb[0].mxu0
      %v2615 = vadd.f32 0.0, %v2614
      %v2616 = vpop.f32.mrb[0].mxu0
      %2617 = vmatprep.mubr.f32.mxu0 0.0
      %2618 = vmatmul.mubr.f32.gmra.mrb[0].mxu0 %v2509
      %v2619 = vpop.f32.mrb[0].mxu0
      %v2620 = vadd.f32 0.0, %v2619
      %v2621 = vpop.f32.mrb[0].mxu0
      %2622 = vmatprep.mubr.f32.mxu0 0.0
      %2623 = vmatmul.mubr.f32.gmra.mrb[0].mxu0 %v2512
      %v2624 = vpop.f32.mrb[0].mxu0
      %v2625 = vadd.f32 0.0, %v2624
      %v2626 = vpop.f32.mrb[0].mxu0
      %2627 = vmatprep.mubr.f32.mxu0 0.0
      %2628 = vmatmul.mubr.f32.gmra.mrb[0].mxu0 %v2515
      %v2629 = vpop.f32.mrb[0].mxu0
      %v2630 = vadd.f32 0.0, %v2629
      %v2631 = vpop.f32.mrb[0].mxu0
      %2632 = vmatprep.mubr.f32.mxu0 0.0
      %2633 = vmatmul.mubr.f32.gmra.mrb[0].mxu0 %v2518
      %v2634 = vpop.f32.mrb[0].mxu0
      %v2635 = vadd.f32 0.0, %v2634
      %v2636 = vpop.f32.mrb[0].mxu0
      %2637 = vmatprep.mubr.f32.mxu0 0.0
      %2638 = vmatmul.mubr.f32.gmra.mrb[0].mxu0 %v2521
      %v2639 = vpop.f32.mrb[0].mxu0
      %v2640 = vadd.f32 0.0, %v2639
      %v2641 = vpop.f32.mrb[0].mxu0
      %2642 = vmatprep.mubr.f32.mxu0 0.0
      %2643 = vmatmul.mubr.f32.gmra.mrb[0].mxu0 %v2524
      %v2644 = vpop.f32.mrb[0].mxu0
      %v2645 = vadd.f32 0.0, %v2644
      %v2646 = vpop.f32.mrb[0].mxu0
      %2647 = vmatprep.mubr.f32.mxu0 0.0
      %2648 = vmatmul.mubr.f32.gmra.mrb[0].mxu0 %v2527
      %v2649 = vpop.f32.mrb[0].mxu0
      %v2650 = vadd.f32 0.0, %v2649
      %v2651 = vpop.f32.mrb[0].mxu0
      %2652 = vmatprep.mubr.f32.mxu0 0.0
      %2653 = vmatmul.mubr.f32.gmra.mrb[0].mxu0 %v2530
      %v2654 = vpop.f32.mrb[0].mxu0
      %v2655 = vadd.f32 0.0, %v2654
      %v2656 = vpop.f32.mrb[0].mxu0
      %2657 = vmatprep.mubr.f32.mxu0 0.0
      %2658 = vmatmul.mubr.f32.gmra.mrb[0].mxu0 %v2533
      %v2659 = vpop.f32.mrb[0].mxu0
      %v2660 = vadd.f32 0.0, %v2659
      %v2661 = vpop.f32.mrb[0].mxu0
      %2662 = vmatprep.mubr.f32.mxu0 0.0
      %2663 = vmatmul.mubr.f32.gmra.mrb[0].mxu0 %v2536
      %v2664 = vpop.f32.mrb[0].mxu0
      %v2665 = vadd.f32 0.0, %v2664
      %v2666 = vpop.f32.mrb[0].mxu0
      %2667 = vdwg.mxu0
      %v2668 = vadd.f32 %v2468, %v2605
      %v2669 = vadd.f32 %v2469, %v2610
      %v2670 = vadd.f32 %v2470, %v2615
      %v2671 = vadd.f32 %v2471, %v2620
      %v2672 = vadd.f32 %v2472, %v2625
      %v2673 = vadd.f32 %v2473, %v2630
      %v2674 = vadd.f32 %v2474, %v2635
      %v2675 = vadd.f32 %v2475, %v2640
      %v2676 = vadd.f32 %v2476, %v2645
      %v2677 = vadd.f32 %v2477, %v2650
      %v2678 = vadd.f32 %v2478, %v2655
      %v2679 = vadd.f32 %v2479, %v2660
      %v2680 = vadd.f32 %v2480, %v2665
      %v2682 = vlaneseq
      %v2683 = vshrl.u32 %v2682, 7
      %v2684 = vsub.s32 0, %v2683
      %v2685 = vrot.slane %v907, %v2684
      %v2687 = vadd.f32 %v2668, %v2685
      %v2688 = vadd.f32 %v2669, %v2685
      %v2689 = vadd.f32 %v2670, %v2685
      %v2690 = vadd.f32 %v2671, %v2685
      %v2691 = vadd.f32 %v2672, %v2685
      %v2692 = vadd.f32 %v2673, %v2685
      %v2693 = vadd.f32 %v2674, %v2685
      %v2694 = vadd.f32 %v2675, %v2685
      %v2695 = vadd.f32 %v2676, %v2685
      %v2696 = vadd.f32 %v2677, %v2685
      %v2697 = vadd.f32 %v2678, %v2685
      %v2698 = vadd.f32 %v2679, %v2685
      %v2699 = vadd.f32 %v2680, %v2685
      %v2700 = vmax.f32 %v2687, 0.0
      %v2701 = vmax.f32 %v2688, 0.0
      %v2702 = vmax.f32 %v2689, 0.0
      %v2703 = vmax.f32 %v2690, 0.0
      %v2704 = vmax.f32 %v2691, 0.0
      %v2705 = vmax.f32 %v2692, 0.0
      %v2706 = vmax.f32 %v2693, 0.0
      %v2707 = vmax.f32 %v2694, 0.0
      %v2708 = vmax.f32 %v2695, 0.0
      %v2709 = vmax.f32 %v2696, 0.0
      %v2710 = vmax.f32 %v2697, 0.0
      %v2711 = vmax.f32 %v2698, 0.0
      %v2712 = vmax.f32 %v2699, 0.0
      %2713 = vst.msk [vmem:[%s251] sm:$0xff] %vm295, %v2700
      %2714 = vst.msk [vmem:[%s251 + $0x8] sm:$0xff] %vm295, %v2701
      %2715 = vst.msk [vmem:[%s251 + $0x10] sm:$0xff] %vm295, %v2702
      %2716 = vst.msk [vmem:[%s251 + $0x18] sm:$0xff] %vm295, %v2703
      %2717 = vst.msk [vmem:[%s251 + $0x20] sm:$0xff] %vm295, %v2704
      %2718 = vst.msk [vmem:[%s251 + $0x28] sm:$0xff] %vm295, %v2705
      %2719 = vst.msk [vmem:[%s251 + $0x30] sm:$0xff] %vm295, %v2706
      %2720 = vst.msk [vmem:[%s251 + $0x38] sm:$0xff] %vm295, %v2707
      %2721 = vst.msk [vmem:[%s251 + $0x40] sm:$0xff] %vm295, %v2708
      %2722 = vst.msk [vmem:[%s251 + $0x48] sm:$0xff] %vm295, %v2709
      %2723 = vst.msk [vmem:[%s251 + $0x50] sm:$0xff] %vm295, %v2710
      %2724 = vst.msk [vmem:[%s251 + $0x58] sm:$0xff] %vm295, %v2711
      %vm2725 = vcmask 257024
      %2726 = vst.msk [vmem:[%s251 + $0x60] sm:$0xf] %vm2725, %v2712
      %p2727 = scmp.lt.s32.totalorder %s17, 1
      %s2728 = scalar_select %p2727, %s17, 1
      %s2729 = smul.addr %s2728, 13
      %s2730 = smul.addr %s2729, 8
      %s2731 = scalar_lea.vmem %s6, %s2730
      // Predicated region
      $region45: #{tpu_custom_call.1} parent=43 // pred_check
        %p2732 = pneg %p166
      $region46: #{tpu_custom_call.1} parent=43 // pred_check_branch
        %2734 = sbr.rel (%p2732) target = $region48
      $region47: #{tpu_custom_call.1} parent=43 // pred_region
        _
      $region48: #{tpu_custom_call.1} parent=43 // pred_fallthru
        _
    $region44: #{tpu_custom_call.1} parent=5 // pred_fallthru
      _
    %p2735 = scmp.le.s32.totalorder 2, %s12
    // Predicated region
    $region49: #{tpu_custom_call.1} parent=5 // pred_check
      %p2736 = pneg %p2735
    $region50: #{tpu_custom_call.1} parent=5 // pred_check_branch
      %2738 = sbr.rel (%p2736) target = $region52
    $region51: #{tpu_custom_call.1} parent=5 // pred_region
      %s2739 = ssub.s32 %s12, 2
      // Predicated region
      $region53: #{tpu_custom_call.1} parent=51 // pred_check
        %p2740 = pneg %p172
      $region54: #{tpu_custom_call.1} parent=51 // pred_check_branch
        %2742 = sbr.rel (%p2740) target = $region56
      $region55: #{tpu_custom_call.1} parent=51 // pred_region
        %p2743 = scmp.lt.s32.totalorder %s18, 1
        %s2744 = scalar_select %p2743, %s18, 1
        %s2745 = smul.addr %s2744, 13
        %s2746 = smul.addr %s2745, 8
        %s2747 = scalar_lea.vmem %s6, %s2746
      $region56: #{tpu_custom_call.1} parent=51 // pred_fallthru
        _
    $region52: #{tpu_custom_call.1} parent=5 // pred_fallthru
      _
  $region6: #{tpu_custom_call.1} parent=0 // loop_footer
    %s16 = sadd.s32 1, %s12
  $region7: #{tpu_custom_call.1} parent=0 // loop_footer_branch
    %11 = sbr.rel target = $region3
  $region8: #{tpu_custom_call.1} parent=0 // loop_exit
    _

</llo_original>
